<compile_context>
chip_gen: v6e
topology: v6e:2x2x1
jax: 0.10.0
libtpu: 0.0.40
codegen_flags: <defaults>
</compile_context>

<pallas_src>
import jax
import jax.numpy as jnp
from jax.experimental import pallas as pl
from jax.experimental.pallas import tpu as pltpu

# Fixed architecture (fc1 expects 32*122 features => input length 494).
C1, C2, K = 16, 32, 3          # conv1/conv2 out-channels, kernel size
H1, NCLS = 128, 2              # fc1 hidden, #classes
L_IN = 494                     # input length
L2 = 122                       # pooled length after conv2 (= 3904 / 32)
LPAD = 128                     # per-channel lane padding of the fc1 features
FPAD = C2 * LPAD               # 4096 padded fc1 input features
TH = 64                        # fc1 output chunk per grid step
NH = H1 // TH                  # grid size (2)


# ------------------------------ Pallas kernel ------------------------------ #

def fused_cnn_kernel(x_ref, c1w_ref, c1b_ref, c2wf_ref, c2b_ref,
                     w1p_ref, b1_ref, h_ref):
    """conv1+relu+pool -> conv2+relu+pool -> relu(fc1) for one 64-wide fc1 chunk.

    x_ref   : (B, 4, S) f32   stride-4 phase split, x_ref[b,r,s] = x[b, 4s+r]
    c1w_ref : (16, 3)  f32    conv1 weight (Cin = 1)
    c1b_ref : (16, 1)  f32
    c2wf_ref: (32, 48) f32    [tap0 | tap1 | tap2], tap_k = conv2_w[:, :, k]
    c2b_ref : (32, 1)  f32
    w1p_ref : (TH, 4096) bf16 fc1 weight chunk (lane-padded channel-major flatten)
    b1_ref  : (1, 1, TH) f32  fc1 bias chunk
    h_ref   : (1, B, TH) f32  relu(fc1) output chunk
    """
    B = x_ref.shape[0]
    S = x_ref.shape[2]          # 124
    n1 = S - 1                  # 123 pooled conv1 positions per parity per batch
    n2 = n1 - 1                 # 122 pooled conv2 positions per batch

    # ---- conv1 (K=3, Cin=1) + ReLU + MaxPool(2); batch concatenated on lanes.
    xs = [[], [], [], [], [], []]
    for b in range(B):
        xb = x_ref[b]                               # (4, S)
        xs[0].append(xb[0:1, 0:n1])                 # x[4s]
        xs[1].append(xb[1:2, 0:n1])                 # x[4s+1]
        xs[2].append(xb[2:3, 0:n1])                 # x[4s+2]
        xs[3].append(xb[3:4, 0:n1])                 # x[4s+3]
        xs[4].append(xb[0:1, 1:n1 + 1])             # x[4s+4]
        xs[5].append(xb[1:2, 1:n1 + 1])             # x[4s+5]
    x0, x1, x2, x3, x0n, x1n = (jnp.concatenate(p, axis=1) for p in xs)  # (1, B*n1)

    wk0 = c1w_ref[:, 0:1]                           # (16, 1)
    wk1 = c1w_ref[:, 1:2]
    wk2 = c1w_ref[:, 2:3]
    c1b = c1b_ref[...]
    y_a = wk0 * x0 + wk1 * x1 + wk2 * x2 + c1b      # conv1 at 4s     (16, B*n1)
    y_b = wk0 * x1 + wk1 * x2 + wk2 * x3 + c1b      # conv1 at 4s+1
    y_c = wk0 * x2 + wk1 * x3 + wk2 * x0n + c1b     # conv1 at 4s+2
    y_d = wk0 * x3 + wk1 * x0n + wk2 * x1n + c1b    # conv1 at 4s+3
    p1e = jnp.maximum(jnp.maximum(y_a, y_b), 0.0)   # pooled conv1, even columns
    p1o = jnp.maximum(jnp.maximum(y_c, y_d), 0.0)   # pooled conv1, odd columns

    # ---- conv2 + ReLU + MaxPool(2): ONE MXU matmul over the fused 3-tap weight,
    # with batch and even/odd pooling parity stacked along lanes.
    row0, row1, row2 = [], [], []
    for b in range(B):
        base = b * n1
        a0 = p1e[:, base:base + n2]                 # p1[:, 2t]
        a1 = p1o[:, base:base + n2]                 # p1[:, 2t+1]
        a2 = p1e[:, base + 1:base + 1 + n2]         # p1[:, 2t+2]
        a3 = p1o[:, base + 1:base + 1 + n2]         # p1[:, 2t+3]
        row0 += [a0, a1]
        row1 += [a1, a2]
        row2 += [a2, a3]
    rhs = jnp.concatenate([jnp.concatenate(row0, axis=1),
                           jnp.concatenate(row1, axis=1),
                           jnp.concatenate(row2, axis=1)], axis=0)   # (48, B*2*n2)
    conv2 = jnp.dot(c2wf_ref[...], rhs,
                    preferred_element_type=jnp.float32) + c2b_ref[...]  # (32, B*2*n2)

    # ---- pack relu(pool(conv2)) into a lane-aligned, channel-major flat row per
    # batch: lanes [c*128, c*128+122) hold channel c; pad lanes are zero and the
    # matching w1p columns are zero too.
    zpad = jnp.zeros((C2, LPAD - n2), jnp.float32)
    lhs_rows = []
    for b in range(B):
        cb = b * 2 * n2
        p2 = jnp.maximum(jnp.maximum(conv2[:, cb:cb + n2],
                                     conv2[:, cb + n2:cb + 2 * n2]), 0.0)  # (32, 122)
        p2p = jnp.concatenate([p2, zpad], axis=1).astype(jnp.bfloat16)     # (32, 128)
        lhs_rows.append(jnp.concatenate([p2p[c:c + 1, :] for c in range(C2)],
                                        axis=1))                           # (1, 4096)
    lhs = jnp.concatenate(lhs_rows, axis=0)                                # (B, 4096)

    # ---- fc1 chunk: ONE bf16 MXU matmul (B,4096) x (TH,4096)^T, f32 accumulation.
    acc = jax.lax.dot_general(lhs, w1p_ref[...],
                              dimension_numbers=(((1,), (1,)), ((), ())),
                              preferred_element_type=jnp.float32)          # (B, TH)
    h_ref[0, :, :] = jnp.maximum(acc + b1_ref[0], 0.0)


# ------------------------------- JAX wrappers ------------------------------ #

def prepare_params(params):
    """One-time conversion of PyTorch-layout params to kernel-friendly layouts
    (done eagerly, OUTSIDE the jitted forward)."""
    c1w = params["conv1_w"].reshape(C1, K).astype(jnp.float32)          # Cin = 1
    c1b = params["conv1_b"].reshape(C1, 1).astype(jnp.float32)
    # conv2 taps fused along the contraction dim: [w[:,:,0] | w[:,:,1] | w[:,:,2]].
    c2wf = jnp.concatenate([params["conv2_w"][:, :, k] for k in range(K)],
                           axis=1).astype(jnp.float32)                  # (32, 48)
    c2b = params["conv2_b"].reshape(C2, 1).astype(jnp.float32)
    # fc1 weight: channel-major flatten with each channel zero-padded from 122
    # to 128 lanes, stored bf16: w1p[j, c*128 + l] = fc1_w[j, c*122 + l].
    w1r = params["fc1_w"].reshape(H1, C2, L2)
    w1p = jnp.pad(w1r, ((0, 0), (0, 0), (0, LPAD - L2))).reshape(H1, FPAD)
    w1p = w1p.astype(jnp.bfloat16)                                      # (128, 4096)
    b1 = params["fc1_b"].reshape(NH, 1, TH).astype(jnp.float32)
    w2t = params["fc2_w"].T.astype(jnp.float32)                         # (128, 2)
    b2 = params["fc2_b"].astype(jnp.float32)
    return {"c1w": c1w, "c1b": c1b, "c2wf": c2wf, "c2b": c2b,
            "w1p": w1p, "b1": b1, "w2t": w2t, "b2": b2}


def simple_cnn_forward(x, kp):
    """x: (B, 1, 494) float32 -> logits (B, 2). Mirrors SimpleCNN.forward."""
    B, _, L = x.shape
    # Stride-4 phase split of the raw input (inside the same jit as the kernel):
    # xph[b, r, s] = x[b, 4s + r], zero-padded at the tail.
    pad = (-L) % 4
    xp = jnp.pad(x.reshape(B, L), ((0, 0), (0, pad)))
    S = (L + pad) // 4
    xph = xp.reshape(B, S, 4).transpose(0, 2, 1)            # (B, 4, S)

    h_chunks = pl.pallas_call(
        fused_cnn_kernel,
        out_shape=jax.ShapeDtypeStruct((NH, B, TH), jnp.float32),
        grid=(NH,),
        in_specs=[
            pl.BlockSpec((B, 4, S), lambda i: (0, 0, 0)),
            pl.BlockSpec((C1, K), lambda i: (0, 0)),
            pl.BlockSpec((C1, 1), lambda i: (0, 0)),
            pl.BlockSpec((C2, K * C1), lambda i: (0, 0)),
            pl.BlockSpec((C2, 1), lambda i: (0, 0)),
            pl.BlockSpec((TH, FPAD), lambda i: (i, 0)),     # streamed fc1 weight
            pl.BlockSpec((1, 1, TH), lambda i: (i, 0, 0)),  # fc1 bias chunk
        ],
        out_specs=pl.BlockSpec((1, B, TH), lambda i: (i, 0, 0)),
        compiler_params=pltpu.CompilerParams(
            dimension_semantics=("parallel",)),
    )(xph, kp["c1w"], kp["c1b"], kp["c2wf"], kp["c2b"], kp["w1p"], kp["b1"])

    h = jnp.swapaxes(h_chunks, 0, 1).reshape(B, H1)         # relu(fc1), (B, 128)
    return h @ kp["w2t"] + kp["b2"]                         # trivial fc2, same jit


# ------------------------------ pure-JAX reference ------------------------- #

def reference_forward(x, params):
    """Plain-jnp reimplementation of SimpleCNN.forward (for verification)."""
    with jax.default_matmul_precision("highest"):
        B = x.shape[0]

        def conv1d(x_ncl, w, b):
            Cout, Cin, Kk = w.shape
            Lout = x_ncl.shape[-1] - Kk + 1
            cols = jnp.stack([x_ncl[:, :, k:k + Lout] for k in range(Kk)], axis=-1)
            return jnp.einsum("bclk,ock->bol", cols, w) + b[None, :, None]

        def pool2(y):
            L = y.shape[-1] // 2 * 2
            return jnp.maximum(y[..., 0:L:2], y[..., 1:L:2])

        h = pool2(jax.nn.relu(conv1d(x, params["conv1_w"], params["conv1_b"])))
        h = pool2(jax.nn.relu(conv1d(h, params["conv2_w"], params["conv2_b"])))
        flat = h.reshape(B, C2 * L2)
        h = jax.nn.relu(flat @ params["fc1_w"].T + params["fc1_b"])
        return h @ params["fc2_w"].T + params["fc2_b"]


# ---------------------------------- main ----------------------------------- #

def init_params(key):
    ks = jax.random.split(key, 8)
    s = 0.1
    return {
        "conv1_w": s * jax.random.normal(ks[0], (C1, 1, K), jnp.float32),
        "conv1_b": s * jax.random.normal(ks[1], (C1,), jnp.float32),
        "conv2_w": s * jax.random.normal(ks[2], (C2, C1, K), jnp.float32),
        "conv2_b": s * jax.random.normal(ks[3], (C2,), jnp.float32),
        "fc1_w":   s * jax.random.normal(ks[4], (H1, C2 * L2), jnp.float32),
        "fc1_b":   s * jax.random.normal(ks[5], (H1,), jnp.float32),
        "fc2_w":   s * jax.random.normal(ks[6], (NCLS, H1), jnp.float32),
        "fc2_b":   s * jax.random.normal(ks[7], (NCLS,), jnp.float32),
    }


if __name__ == "__main__":
    key = jax.random.PRNGKey(0)
    kparam, kx = jax.random.split(key)
    params = init_params(kparam)
    kparams = prepare_params(params)      # one-time layout prep, outside jit

    # Input length 494 implied by fc1's 32*122 features: ((494-2)//2 - 2)//2 == 122.
    x = jax.random.normal(kx, (2, 1, L_IN), jnp.float32)

    logits = jax.jit(simple_cnn_forward)(x, kparams)
    jax.block_until_ready(logits)

    ref = reference_forward(x, params)
    assert logits.shape == (2, NCLS) and logits.dtype == jnp.float32
    # bf16 fc1 weights/activations -> bf16-appropriate tolerance.
    assert bool(jnp.allclose(logits, ref, atol=2e-2, rtol=2e-2)), (logits, ref)
    print("KERNEL_OK")
</pallas_src>

<mosaic_0001>
module attributes {stable_mosaic.version = 11 : i64} {
  func.func @fused_cnn_kernel(%arg0: i32, %arg1: memref<2x4x124xf32, #tpu.memory_space<vmem>>, %arg2: memref<16x3xf32, #tpu.memory_space<vmem>>, %arg3: memref<16x1xf32, #tpu.memory_space<vmem>>, %arg4: memref<32x48xf32, #tpu.memory_space<vmem>>, %arg5: memref<32x1xf32, #tpu.memory_space<vmem>>, %arg6: memref<64x4096xbf16, #tpu.memory_space<vmem>>, %arg7: memref<1x1x64xf32, #tpu.memory_space<vmem>>, %arg8: memref<1x2x64xf32, #tpu.memory_space<vmem>>) attributes {dimension_semantics = [#tpu.dimension_semantics<parallel>], iteration_bounds = array<i64: 2>, scalar_prefetch = 0 : i64, scratch_operands = 0 : i64, tpu.core_type = #tpu.core_type<tc>, window_params = [{pipeline_mode = #tpu.pipeline_mode<synchronous>, transform_indices = @transform_0, window_bounds = array<i64: 2, 4, 124>}, {pipeline_mode = #tpu.pipeline_mode<synchronous>, transform_indices = @transform_1, window_bounds = array<i64: 16, 3>}, {pipeline_mode = #tpu.pipeline_mode<synchronous>, transform_indices = @transform_2, window_bounds = array<i64: 16, 1>}, {pipeline_mode = #tpu.pipeline_mode<synchronous>, transform_indices = @transform_3, window_bounds = array<i64: 32, 48>}, {pipeline_mode = #tpu.pipeline_mode<synchronous>, transform_indices = @transform_4, window_bounds = array<i64: 32, 1>}, {transform_indices = @transform_5, window_bounds = array<i64: 64, 4096>}, {transform_indices = @transform_6, window_bounds = array<i64: 1, 1, 64>}, {transform_indices = @transform_7, window_bounds = array<i64: 1, 2, 64>}]} {
    %c0 = arith.constant 0 : index
    %c0_0 = arith.constant 0 : index
    %c0_1 = arith.constant 0 : index
    %0 = vector.load %arg1[%c0, %c0_0, %c0_1] : memref<2x4x124xf32, #tpu.memory_space<vmem>>, vector<1x4x124xf32>
    %1 = vector.shape_cast %0 : vector<1x4x124xf32> to vector<4x124xf32>
    %2 = vector.extract_strided_slice %1 {offsets = [0, 0], sizes = [1, 123], strides = [1, 1]} : vector<4x124xf32> to vector<1x123xf32>
    %3 = vector.extract_strided_slice %1 {offsets = [1, 0], sizes = [1, 123], strides = [1, 1]} : vector<4x124xf32> to vector<1x123xf32>
    %4 = vector.extract_strided_slice %1 {offsets = [2, 0], sizes = [1, 123], strides = [1, 1]} : vector<4x124xf32> to vector<1x123xf32>
    %5 = vector.extract_strided_slice %1 {offsets = [3, 0], sizes = [1, 123], strides = [1, 1]} : vector<4x124xf32> to vector<1x123xf32>
    %6 = vector.extract_strided_slice %1 {offsets = [0, 1], sizes = [1, 123], strides = [1, 1]} : vector<4x124xf32> to vector<1x123xf32>
    %7 = vector.extract_strided_slice %1 {offsets = [1, 1], sizes = [1, 123], strides = [1, 1]} : vector<4x124xf32> to vector<1x123xf32>
    %c1 = arith.constant 1 : index
    %c0_2 = arith.constant 0 : index
    %c0_3 = arith.constant 0 : index
    %8 = vector.load %arg1[%c1, %c0_2, %c0_3] : memref<2x4x124xf32, #tpu.memory_space<vmem>>, vector<1x4x124xf32>
    %9 = vector.shape_cast %8 : vector<1x4x124xf32> to vector<4x124xf32>
    %10 = vector.extract_strided_slice %9 {offsets = [0, 0], sizes = [1, 123], strides = [1, 1]} : vector<4x124xf32> to vector<1x123xf32>
    %11 = vector.extract_strided_slice %9 {offsets = [1, 0], sizes = [1, 123], strides = [1, 1]} : vector<4x124xf32> to vector<1x123xf32>
    %12 = vector.extract_strided_slice %9 {offsets = [2, 0], sizes = [1, 123], strides = [1, 1]} : vector<4x124xf32> to vector<1x123xf32>
    %13 = vector.extract_strided_slice %9 {offsets = [3, 0], sizes = [1, 123], strides = [1, 1]} : vector<4x124xf32> to vector<1x123xf32>
    %14 = vector.extract_strided_slice %9 {offsets = [0, 1], sizes = [1, 123], strides = [1, 1]} : vector<4x124xf32> to vector<1x123xf32>
    %15 = vector.extract_strided_slice %9 {offsets = [1, 1], sizes = [1, 123], strides = [1, 1]} : vector<4x124xf32> to vector<1x123xf32>
    %16 = tpu.concatenate %2, %10 in 1 : vector<1x123xf32>, vector<1x123xf32> -> vector<1x246xf32>
    %17 = tpu.concatenate %3, %11 in 1 : vector<1x123xf32>, vector<1x123xf32> -> vector<1x246xf32>
    %18 = tpu.concatenate %4, %12 in 1 : vector<1x123xf32>, vector<1x123xf32> -> vector<1x246xf32>
    %19 = tpu.concatenate %5, %13 in 1 : vector<1x123xf32>, vector<1x123xf32> -> vector<1x246xf32>
    %20 = tpu.concatenate %6, %14 in 1 : vector<1x123xf32>, vector<1x123xf32> -> vector<1x246xf32>
    %21 = tpu.concatenate %7, %15 in 1 : vector<1x123xf32>, vector<1x123xf32> -> vector<1x246xf32>
    %c0_4 = arith.constant 0 : index
    %c0_5 = arith.constant 0 : index
    %22 = vector.load %arg2[%c0_4, %c0_5] : memref<16x3xf32, #tpu.memory_space<vmem>>, vector<16x1xf32>
    %c0_6 = arith.constant 0 : index
    %c1_7 = arith.constant 1 : index
    %23 = vector.load %arg2[%c0_6, %c1_7] : memref<16x3xf32, #tpu.memory_space<vmem>>, vector<16x1xf32>
    %c0_8 = arith.constant 0 : index
    %c2 = arith.constant 2 : index
    %24 = vector.load %arg2[%c0_8, %c2] : memref<16x3xf32, #tpu.memory_space<vmem>>, vector<16x1xf32>
    %c0_9 = arith.constant 0 : index
    %c0_10 = arith.constant 0 : index
    %25 = vector.load %arg3[%c0_9, %c0_10] : memref<16x1xf32, #tpu.memory_space<vmem>>, vector<16x1xf32>
    %26 = vector.broadcast %22 : vector<16x1xf32> to vector<16x246xf32>
    %27 = vector.broadcast %16 : vector<1x246xf32> to vector<16x246xf32>
    %28 = arith.mulf %26, %27 : vector<16x246xf32>
    %29 = vector.broadcast %23 : vector<16x1xf32> to vector<16x246xf32>
    %30 = vector.broadcast %17 : vector<1x246xf32> to vector<16x246xf32>
    %31 = arith.mulf %29, %30 : vector<16x246xf32>
    %32 = arith.addf %28, %31 : vector<16x246xf32>
    %33 = vector.broadcast %24 : vector<16x1xf32> to vector<16x246xf32>
    %34 = vector.broadcast %18 : vector<1x246xf32> to vector<16x246xf32>
    %35 = arith.mulf %33, %34 : vector<16x246xf32>
    %36 = arith.addf %32, %35 : vector<16x246xf32>
    %37 = vector.broadcast %25 : vector<16x1xf32> to vector<16x246xf32>
    %38 = arith.addf %36, %37 : vector<16x246xf32>
    %39 = vector.broadcast %22 : vector<16x1xf32> to vector<16x246xf32>
    %40 = vector.broadcast %17 : vector<1x246xf32> to vector<16x246xf32>
    %41 = arith.mulf %39, %40 : vector<16x246xf32>
    %42 = vector.broadcast %23 : vector<16x1xf32> to vector<16x246xf32>
    %43 = vector.broadcast %18 : vector<1x246xf32> to vector<16x246xf32>
    %44 = arith.mulf %42, %43 : vector<16x246xf32>
    %45 = arith.addf %41, %44 : vector<16x246xf32>
    %46 = vector.broadcast %24 : vector<16x1xf32> to vector<16x246xf32>
    %47 = vector.broadcast %19 : vector<1x246xf32> to vector<16x246xf32>
    %48 = arith.mulf %46, %47 : vector<16x246xf32>
    %49 = arith.addf %45, %48 : vector<16x246xf32>
    %50 = vector.broadcast %25 : vector<16x1xf32> to vector<16x246xf32>
    %51 = arith.addf %49, %50 : vector<16x246xf32>
    %52 = vector.broadcast %22 : vector<16x1xf32> to vector<16x246xf32>
    %53 = vector.broadcast %18 : vector<1x246xf32> to vector<16x246xf32>
    %54 = arith.mulf %52, %53 : vector<16x246xf32>
    %55 = vector.broadcast %23 : vector<16x1xf32> to vector<16x246xf32>
    %56 = vector.broadcast %19 : vector<1x246xf32> to vector<16x246xf32>
    %57 = arith.mulf %55, %56 : vector<16x246xf32>
    %58 = arith.addf %54, %57 : vector<16x246xf32>
    %59 = vector.broadcast %24 : vector<16x1xf32> to vector<16x246xf32>
    %60 = vector.broadcast %20 : vector<1x246xf32> to vector<16x246xf32>
    %61 = arith.mulf %59, %60 : vector<16x246xf32>
    %62 = arith.addf %58, %61 : vector<16x246xf32>
    %63 = vector.broadcast %25 : vector<16x1xf32> to vector<16x246xf32>
    %64 = arith.addf %62, %63 : vector<16x246xf32>
    %65 = vector.broadcast %22 : vector<16x1xf32> to vector<16x246xf32>
    %66 = vector.broadcast %19 : vector<1x246xf32> to vector<16x246xf32>
    %67 = arith.mulf %65, %66 : vector<16x246xf32>
    %68 = vector.broadcast %23 : vector<16x1xf32> to vector<16x246xf32>
    %69 = vector.broadcast %20 : vector<1x246xf32> to vector<16x246xf32>
    %70 = arith.mulf %68, %69 : vector<16x246xf32>
    %71 = arith.addf %67, %70 : vector<16x246xf32>
    %72 = vector.broadcast %24 : vector<16x1xf32> to vector<16x246xf32>
    %73 = vector.broadcast %21 : vector<1x246xf32> to vector<16x246xf32>
    %74 = arith.mulf %72, %73 : vector<16x246xf32>
    %75 = arith.addf %71, %74 : vector<16x246xf32>
    %76 = vector.broadcast %25 : vector<16x1xf32> to vector<16x246xf32>
    %77 = arith.addf %75, %76 : vector<16x246xf32>
    %78 = arith.maximumf %38, %51 : vector<16x246xf32>
    %cst = arith.constant 0.000000e+00 : f32
    %79 = vector.broadcast %cst : f32 to vector<16x246xf32>
    %80 = arith.maximumf %78, %79 : vector<16x246xf32>
    %81 = arith.maximumf %64, %77 : vector<16x246xf32>
    %cst_11 = arith.constant 0.000000e+00 : f32
    %82 = vector.broadcast %cst_11 : f32 to vector<16x246xf32>
    %83 = arith.maximumf %81, %82 : vector<16x246xf32>
    %84 = vector.extract_strided_slice %80 {offsets = [0, 0], sizes = [16, 122], strides = [1, 1]} : vector<16x246xf32> to vector<16x122xf32>
    %85 = vector.extract_strided_slice %83 {offsets = [0, 0], sizes = [16, 122], strides = [1, 1]} : vector<16x246xf32> to vector<16x122xf32>
    %86 = vector.extract_strided_slice %80 {offsets = [0, 1], sizes = [16, 122], strides = [1, 1]} : vector<16x246xf32> to vector<16x122xf32>
    %87 = vector.extract_strided_slice %83 {offsets = [0, 1], sizes = [16, 122], strides = [1, 1]} : vector<16x246xf32> to vector<16x122xf32>
    %88 = vector.extract_strided_slice %80 {offsets = [0, 123], sizes = [16, 122], strides = [1, 1]} : vector<16x246xf32> to vector<16x122xf32>
    %89 = vector.extract_strided_slice %83 {offsets = [0, 123], sizes = [16, 122], strides = [1, 1]} : vector<16x246xf32> to vector<16x122xf32>
    %90 = vector.extract_strided_slice %80 {offsets = [0, 124], sizes = [16, 122], strides = [1, 1]} : vector<16x246xf32> to vector<16x122xf32>
    %91 = vector.extract_strided_slice %83 {offsets = [0, 124], sizes = [16, 122], strides = [1, 1]} : vector<16x246xf32> to vector<16x122xf32>
    %92 = tpu.concatenate %84, %85, %88, %89 in 1 : vector<16x122xf32>, vector<16x122xf32>, vector<16x122xf32>, vector<16x122xf32> -> vector<16x488xf32>
    %93 = tpu.concatenate %85, %86, %89, %90 in 1 : vector<16x122xf32>, vector<16x122xf32>, vector<16x122xf32>, vector<16x122xf32> -> vector<16x488xf32>
    %94 = tpu.concatenate %86, %87, %90, %91 in 1 : vector<16x122xf32>, vector<16x122xf32>, vector<16x122xf32>, vector<16x122xf32> -> vector<16x488xf32>
    %95 = tpu.concatenate %92, %93, %94 in 0 : vector<16x488xf32>, vector<16x488xf32>, vector<16x488xf32> -> vector<48x488xf32>
    %c0_12 = arith.constant 0 : index
    %c0_13 = arith.constant 0 : index
    %96 = vector.load %arg4[%c0_12, %c0_13] : memref<32x48xf32, #tpu.memory_space<vmem>>, vector<32x48xf32>
    %cst_14 = arith.constant dense<0.000000e+00> : vector<32x488xf32>
    %97 = tpu.matmul %96, %95, %cst_14 {dimension_numbers = #tpu.dot_dimension_numbers<[1], [0], [0], [1], [0, 0, 1, 1], [], []>} : vector<32x48xf32>, vector<48x488xf32>, vector<32x488xf32> -> vector<32x488xf32>
    %c0_15 = arith.constant 0 : index
    %c0_16 = arith.constant 0 : index
    %98 = vector.load %arg5[%c0_15, %c0_16] : memref<32x1xf32, #tpu.memory_space<vmem>>, vector<32x1xf32>
    %99 = vector.broadcast %98 : vector<32x1xf32> to vector<32x488xf32>
    %100 = arith.addf %97, %99 : vector<32x488xf32>
    %cst_17 = arith.constant 0.000000e+00 : f32
    %101 = vector.broadcast %cst_17 : f32 to vector<32x6xf32>
    %102 = vector.extract_strided_slice %100 {offsets = [0, 0], sizes = [32, 122], strides = [1, 1]} : vector<32x488xf32> to vector<32x122xf32>
    %103 = vector.extract_strided_slice %100 {offsets = [0, 122], sizes = [32, 122], strides = [1, 1]} : vector<32x488xf32> to vector<32x122xf32>
    %104 = arith.maximumf %102, %103 : vector<32x122xf32>
    %cst_18 = arith.constant 0.000000e+00 : f32
    %105 = vector.broadcast %cst_18 : f32 to vector<32x122xf32>
    %106 = arith.maximumf %104, %105 : vector<32x122xf32>
    %107 = tpu.concatenate %106, %101 in 1 : vector<32x122xf32>, vector<32x6xf32> -> vector<32x128xf32>
    %108 = arith.truncf %107 : vector<32x128xf32> to vector<32x128xbf16>
    %109 = vector.extract_strided_slice %108 {offsets = [0, 0], sizes = [1, 128], strides = [1, 1]} : vector<32x128xbf16> to vector<1x128xbf16>
    %110 = vector.extract_strided_slice %108 {offsets = [1, 0], sizes = [1, 128], strides = [1, 1]} : vector<32x128xbf16> to vector<1x128xbf16>
    %111 = vector.extract_strided_slice %108 {offsets = [2, 0], sizes = [1, 128], strides = [1, 1]} : vector<32x128xbf16> to vector<1x128xbf16>
    %112 = vector.extract_strided_slice %108 {offsets = [3, 0], sizes = [1, 128], strides = [1, 1]} : vector<32x128xbf16> to vector<1x128xbf16>
    %113 = vector.extract_strided_slice %108 {offsets = [4, 0], sizes = [1, 128], strides = [1, 1]} : vector<32x128xbf16> to vector<1x128xbf16>
    %114 = vector.extract_strided_slice %108 {offsets = [5, 0], sizes = [1, 128], strides = [1, 1]} : vector<32x128xbf16> to vector<1x128xbf16>
    %115 = vector.extract_strided_slice %108 {offsets = [6, 0], sizes = [1, 128], strides = [1, 1]} : vector<32x128xbf16> to vector<1x128xbf16>
    %116 = vector.extract_strided_slice %108 {offsets = [7, 0], sizes = [1, 128], strides = [1, 1]} : vector<32x128xbf16> to vector<1x128xbf16>
    %117 = vector.extract_strided_slice %108 {offsets = [8, 0], sizes = [1, 128], strides = [1, 1]} : vector<32x128xbf16> to vector<1x128xbf16>
    %118 = vector.extract_strided_slice %108 {offsets = [9, 0], sizes = [1, 128], strides = [1, 1]} : vector<32x128xbf16> to vector<1x128xbf16>
    %119 = vector.extract_strided_slice %108 {offsets = [10, 0], sizes = [1, 128], strides = [1, 1]} : vector<32x128xbf16> to vector<1x128xbf16>
    %120 = vector.extract_strided_slice %108 {offsets = [11, 0], sizes = [1, 128], strides = [1, 1]} : vector<32x128xbf16> to vector<1x128xbf16>
    %121 = vector.extract_strided_slice %108 {offsets = [12, 0], sizes = [1, 128], strides = [1, 1]} : vector<32x128xbf16> to vector<1x128xbf16>
    %122 = vector.extract_strided_slice %108 {offsets = [13, 0], sizes = [1, 128], strides = [1, 1]} : vector<32x128xbf16> to vector<1x128xbf16>
    %123 = vector.extract_strided_slice %108 {offsets = [14, 0], sizes = [1, 128], strides = [1, 1]} : vector<32x128xbf16> to vector<1x128xbf16>
    %124 = vector.extract_strided_slice %108 {offsets = [15, 0], sizes = [1, 128], strides = [1, 1]} : vector<32x128xbf16> to vector<1x128xbf16>
    %125 = vector.extract_strided_slice %108 {offsets = [16, 0], sizes = [1, 128], strides = [1, 1]} : vector<32x128xbf16> to vector<1x128xbf16>
    %126 = vector.extract_strided_slice %108 {offsets = [17, 0], sizes = [1, 128], strides = [1, 1]} : vector<32x128xbf16> to vector<1x128xbf16>
    %127 = vector.extract_strided_slice %108 {offsets = [18, 0], sizes = [1, 128], strides = [1, 1]} : vector<32x128xbf16> to vector<1x128xbf16>
    %128 = vector.extract_strided_slice %108 {offsets = [19, 0], sizes = [1, 128], strides = [1, 1]} : vector<32x128xbf16> to vector<1x128xbf16>
    %129 = vector.extract_strided_slice %108 {offsets = [20, 0], sizes = [1, 128], strides = [1, 1]} : vector<32x128xbf16> to vector<1x128xbf16>
    %130 = vector.extract_strided_slice %108 {offsets = [21, 0], sizes = [1, 128], strides = [1, 1]} : vector<32x128xbf16> to vector<1x128xbf16>
    %131 = vector.extract_strided_slice %108 {offsets = [22, 0], sizes = [1, 128], strides = [1, 1]} : vector<32x128xbf16> to vector<1x128xbf16>
    %132 = vector.extract_strided_slice %108 {offsets = [23, 0], sizes = [1, 128], strides = [1, 1]} : vector<32x128xbf16> to vector<1x128xbf16>
    %133 = vector.extract_strided_slice %108 {offsets = [24, 0], sizes = [1, 128], strides = [1, 1]} : vector<32x128xbf16> to vector<1x128xbf16>
    %134 = vector.extract_strided_slice %108 {offsets = [25, 0], sizes = [1, 128], strides = [1, 1]} : vector<32x128xbf16> to vector<1x128xbf16>
    %135 = vector.extract_strided_slice %108 {offsets = [26, 0], sizes = [1, 128], strides = [1, 1]} : vector<32x128xbf16> to vector<1x128xbf16>
    %136 = vector.extract_strided_slice %108 {offsets = [27, 0], sizes = [1, 128], strides = [1, 1]} : vector<32x128xbf16> to vector<1x128xbf16>
    %137 = vector.extract_strided_slice %108 {offsets = [28, 0], sizes = [1, 128], strides = [1, 1]} : vector<32x128xbf16> to vector<1x128xbf16>
    %138 = vector.extract_strided_slice %108 {offsets = [29, 0], sizes = [1, 128], strides = [1, 1]} : vector<32x128xbf16> to vector<1x128xbf16>
    %139 = vector.extract_strided_slice %108 {offsets = [30, 0], sizes = [1, 128], strides = [1, 1]} : vector<32x128xbf16> to vector<1x128xbf16>
    %140 = vector.extract_strided_slice %108 {offsets = [31, 0], sizes = [1, 128], strides = [1, 1]} : vector<32x128xbf16> to vector<1x128xbf16>
    %141 = tpu.concatenate %109, %110, %111, %112, %113, %114, %115, %116, %117, %118, %119, %120, %121, %122, %123, %124 in 1 : vector<1x128xbf16>, vector<1x128xbf16>, vector<1x128xbf16>, vector<1x128xbf16>, vector<1x128xbf16>, vector<1x128xbf16>, vector<1x128xbf16>, vector<1x128xbf16>, vector<1x128xbf16>, vector<1x128xbf16>, vector<1x128xbf16>, vector<1x128xbf16>, vector<1x128xbf16>, vector<1x128xbf16>, vector<1x128xbf16>, vector<1x128xbf16> -> vector<1x2048xbf16>
    %142 = tpu.concatenate %125, %126, %127, %128, %129, %130, %131, %132, %133, %134, %135, %136, %137, %138, %139, %140 in 1 : vector<1x128xbf16>, vector<1x128xbf16>, vector<1x128xbf16>, vector<1x128xbf16>, vector<1x128xbf16>, vector<1x128xbf16>, vector<1x128xbf16>, vector<1x128xbf16>, vector<1x128xbf16>, vector<1x128xbf16>, vector<1x128xbf16>, vector<1x128xbf16>, vector<1x128xbf16>, vector<1x128xbf16>, vector<1x128xbf16>, vector<1x128xbf16> -> vector<1x2048xbf16>
    %143 = tpu.concatenate %141, %142 in 1 : vector<1x2048xbf16>, vector<1x2048xbf16> -> vector<1x4096xbf16>
    %144 = vector.extract_strided_slice %100 {offsets = [0, 244], sizes = [32, 122], strides = [1, 1]} : vector<32x488xf32> to vector<32x122xf32>
    %145 = vector.extract_strided_slice %100 {offsets = [0, 366], sizes = [32, 122], strides = [1, 1]} : vector<32x488xf32> to vector<32x122xf32>
    %146 = arith.maximumf %144, %145 : vector<32x122xf32>
    %cst_19 = arith.constant 0.000000e+00 : f32
    %147 = vector.broadcast %cst_19 : f32 to vector<32x122xf32>
    %148 = arith.maximumf %146, %147 : vector<32x122xf32>
    %149 = tpu.concatenate %148, %101 in 1 : vector<32x122xf32>, vector<32x6xf32> -> vector<32x128xf32>
    %150 = arith.truncf %149 : vector<32x128xf32> to vector<32x128xbf16>
    %151 = vector.extract_strided_slice %150 {offsets = [0, 0], sizes = [1, 128], strides = [1, 1]} : vector<32x128xbf16> to vector<1x128xbf16>
    %152 = vector.extract_strided_slice %150 {offsets = [1, 0], sizes = [1, 128], strides = [1, 1]} : vector<32x128xbf16> to vector<1x128xbf16>
    %153 = vector.extract_strided_slice %150 {offsets = [2, 0], sizes = [1, 128], strides = [1, 1]} : vector<32x128xbf16> to vector<1x128xbf16>
    %154 = vector.extract_strided_slice %150 {offsets = [3, 0], sizes = [1, 128], strides = [1, 1]} : vector<32x128xbf16> to vector<1x128xbf16>
    %155 = vector.extract_strided_slice %150 {offsets = [4, 0], sizes = [1, 128], strides = [1, 1]} : vector<32x128xbf16> to vector<1x128xbf16>
    %156 = vector.extract_strided_slice %150 {offsets = [5, 0], sizes = [1, 128], strides = [1, 1]} : vector<32x128xbf16> to vector<1x128xbf16>
    %157 = vector.extract_strided_slice %150 {offsets = [6, 0], sizes = [1, 128], strides = [1, 1]} : vector<32x128xbf16> to vector<1x128xbf16>
    %158 = vector.extract_strided_slice %150 {offsets = [7, 0], sizes = [1, 128], strides = [1, 1]} : vector<32x128xbf16> to vector<1x128xbf16>
    %159 = vector.extract_strided_slice %150 {offsets = [8, 0], sizes = [1, 128], strides = [1, 1]} : vector<32x128xbf16> to vector<1x128xbf16>
    %160 = vector.extract_strided_slice %150 {offsets = [9, 0], sizes = [1, 128], strides = [1, 1]} : vector<32x128xbf16> to vector<1x128xbf16>
    %161 = vector.extract_strided_slice %150 {offsets = [10, 0], sizes = [1, 128], strides = [1, 1]} : vector<32x128xbf16> to vector<1x128xbf16>
    %162 = vector.extract_strided_slice %150 {offsets = [11, 0], sizes = [1, 128], strides = [1, 1]} : vector<32x128xbf16> to vector<1x128xbf16>
    %163 = vector.extract_strided_slice %150 {offsets = [12, 0], sizes = [1, 128], strides = [1, 1]} : vector<32x128xbf16> to vector<1x128xbf16>
    %164 = vector.extract_strided_slice %150 {offsets = [13, 0], sizes = [1, 128], strides = [1, 1]} : vector<32x128xbf16> to vector<1x128xbf16>
    %165 = vector.extract_strided_slice %150 {offsets = [14, 0], sizes = [1, 128], strides = [1, 1]} : vector<32x128xbf16> to vector<1x128xbf16>
    %166 = vector.extract_strided_slice %150 {offsets = [15, 0], sizes = [1, 128], strides = [1, 1]} : vector<32x128xbf16> to vector<1x128xbf16>
    %167 = vector.extract_strided_slice %150 {offsets = [16, 0], sizes = [1, 128], strides = [1, 1]} : vector<32x128xbf16> to vector<1x128xbf16>
    %168 = vector.extract_strided_slice %150 {offsets = [17, 0], sizes = [1, 128], strides = [1, 1]} : vector<32x128xbf16> to vector<1x128xbf16>
    %169 = vector.extract_strided_slice %150 {offsets = [18, 0], sizes = [1, 128], strides = [1, 1]} : vector<32x128xbf16> to vector<1x128xbf16>
    %170 = vector.extract_strided_slice %150 {offsets = [19, 0], sizes = [1, 128], strides = [1, 1]} : vector<32x128xbf16> to vector<1x128xbf16>
    %171 = vector.extract_strided_slice %150 {offsets = [20, 0], sizes = [1, 128], strides = [1, 1]} : vector<32x128xbf16> to vector<1x128xbf16>
    %172 = vector.extract_strided_slice %150 {offsets = [21, 0], sizes = [1, 128], strides = [1, 1]} : vector<32x128xbf16> to vector<1x128xbf16>
    %173 = vector.extract_strided_slice %150 {offsets = [22, 0], sizes = [1, 128], strides = [1, 1]} : vector<32x128xbf16> to vector<1x128xbf16>
    %174 = vector.extract_strided_slice %150 {offsets = [23, 0], sizes = [1, 128], strides = [1, 1]} : vector<32x128xbf16> to vector<1x128xbf16>
    %175 = vector.extract_strided_slice %150 {offsets = [24, 0], sizes = [1, 128], strides = [1, 1]} : vector<32x128xbf16> to vector<1x128xbf16>
    %176 = vector.extract_strided_slice %150 {offsets = [25, 0], sizes = [1, 128], strides = [1, 1]} : vector<32x128xbf16> to vector<1x128xbf16>
    %177 = vector.extract_strided_slice %150 {offsets = [26, 0], sizes = [1, 128], strides = [1, 1]} : vector<32x128xbf16> to vector<1x128xbf16>
    %178 = vector.extract_strided_slice %150 {offsets = [27, 0], sizes = [1, 128], strides = [1, 1]} : vector<32x128xbf16> to vector<1x128xbf16>
    %179 = vector.extract_strided_slice %150 {offsets = [28, 0], sizes = [1, 128], strides = [1, 1]} : vector<32x128xbf16> to vector<1x128xbf16>
    %180 = vector.extract_strided_slice %150 {offsets = [29, 0], sizes = [1, 128], strides = [1, 1]} : vector<32x128xbf16> to vector<1x128xbf16>
    %181 = vector.extract_strided_slice %150 {offsets = [30, 0], sizes = [1, 128], strides = [1, 1]} : vector<32x128xbf16> to vector<1x128xbf16>
    %182 = vector.extract_strided_slice %150 {offsets = [31, 0], sizes = [1, 128], strides = [1, 1]} : vector<32x128xbf16> to vector<1x128xbf16>
    %183 = tpu.concatenate %151, %152, %153, %154, %155, %156, %157, %158, %159, %160, %161, %162, %163, %164, %165, %166 in 1 : vector<1x128xbf16>, vector<1x128xbf16>, vector<1x128xbf16>, vector<1x128xbf16>, vector<1x128xbf16>, vector<1x128xbf16>, vector<1x128xbf16>, vector<1x128xbf16>, vector<1x128xbf16>, vector<1x128xbf16>, vector<1x128xbf16>, vector<1x128xbf16>, vector<1x128xbf16>, vector<1x128xbf16>, vector<1x128xbf16>, vector<1x128xbf16> -> vector<1x2048xbf16>
    %184 = tpu.concatenate %167, %168, %169, %170, %171, %172, %173, %174, %175, %176, %177, %178, %179, %180, %181, %182 in 1 : vector<1x128xbf16>, vector<1x128xbf16>, vector<1x128xbf16>, vector<1x128xbf16>, vector<1x128xbf16>, vector<1x128xbf16>, vector<1x128xbf16>, vector<1x128xbf16>, vector<1x128xbf16>, vector<1x128xbf16>, vector<1x128xbf16>, vector<1x128xbf16>, vector<1x128xbf16>, vector<1x128xbf16>, vector<1x128xbf16>, vector<1x128xbf16> -> vector<1x2048xbf16>
    %185 = tpu.concatenate %183, %184 in 1 : vector<1x2048xbf16>, vector<1x2048xbf16> -> vector<1x4096xbf16>
    %186 = tpu.concatenate %143, %185 in 0 : vector<1x4096xbf16>, vector<1x4096xbf16> -> vector<2x4096xbf16>
    %c0_20 = arith.constant 0 : index
    %c0_21 = arith.constant 0 : index
    %187 = vector.load %arg6[%c0_20, %c0_21] : memref<64x4096xbf16, #tpu.memory_space<vmem>>, vector<64x4096xbf16>
    %cst_22 = arith.constant dense<0.000000e+00> : vector<2x64xf32>
    %188 = tpu.matmul %186, %187, %cst_22 {dimension_numbers = #tpu.dot_dimension_numbers<[1], [1], [0], [0], [0, 0, 1, 0], [], []>} : vector<2x4096xbf16>, vector<64x4096xbf16>, vector<2x64xf32> -> vector<2x64xf32>
    %c0_23 = arith.constant 0 : index
    %c0_24 = arith.constant 0 : index
    %c0_25 = arith.constant 0 : index
    %189 = vector.load %arg7[%c0_23, %c0_24, %c0_25] : memref<1x1x64xf32, #tpu.memory_space<vmem>>, vector<1x1x64xf32>
    %190 = vector.shape_cast %189 : vector<1x1x64xf32> to vector<1x64xf32>
    %191 = vector.broadcast %190 : vector<1x64xf32> to vector<2x64xf32>
    %192 = arith.addf %188, %191 : vector<2x64xf32>
    %cst_26 = arith.constant 0.000000e+00 : f32
    %193 = vector.broadcast %cst_26 : f32 to vector<2x64xf32>
    %194 = arith.maximumf %192, %193 : vector<2x64xf32>
    %c0_27 = arith.constant 0 : index
    %c0_28 = arith.constant 0 : index
    %c0_29 = arith.constant 0 : index
    %195 = vector.load %arg8[%c0_27, %c0_28, %c0_29] : memref<1x2x64xf32, #tpu.memory_space<vmem>>, vector<1x2x64xf32>
    %196 = vector.shape_cast %195 : vector<1x2x64xf32> to vector<2x64xf32>
    %197 = vector.shape_cast %194 : vector<2x64xf32> to vector<1x2x64xf32>
    tpu.vector_store %arg8[%c0_27, %c0_28, %c0_29], %197 {strides = array<i32>} : memref<1x2x64xf32, #tpu.memory_space<vmem>>, vector<1x2x64xf32>,
    return
  }
  func.func @transform_0(%arg0: i32) -> (i32, i32, i32) {
    %c0_i32 = arith.constant 0 : i32
    %c0_i32_0 = arith.constant 0 : i32
    %c0_i32_1 = arith.constant 0 : i32
    %c0_i32_2 = arith.constant 0 : i32
    return %c0_i32, %c0_i32_0, %c0_i32_1 : i32, i32, i32
  }
  func.func @transform_1(%arg0: i32) -> (i32, i32) {
    %c0_i32 = arith.constant 0 : i32
    %c0_i32_0 = arith.constant 0 : i32
    %c0_i32_1 = arith.constant 0 : i32
    return %c0_i32, %c0_i32_0 : i32, i32
  }
  func.func @transform_2(%arg0: i32) -> (i32, i32) {
    %c0_i32 = arith.constant 0 : i32
    %c0_i32_0 = arith.constant 0 : i32
    %c0_i32_1 = arith.constant 0 : i32
    return %c0_i32, %c0_i32_0 : i32, i32
  }
  func.func @transform_3(%arg0: i32) -> (i32, i32) {
    %c0_i32 = arith.constant 0 : i32
    %c0_i32_0 = arith.constant 0 : i32
    %c0_i32_1 = arith.constant 0 : i32
    return %c0_i32, %c0_i32_0 : i32, i32
  }
  func.func @transform_4(%arg0: i32) -> (i32, i32) {
    %c0_i32 = arith.constant 0 : i32
    %c0_i32_0 = arith.constant 0 : i32
    %c0_i32_1 = arith.constant 0 : i32
    return %c0_i32, %c0_i32_0 : i32, i32
  }
  func.func @transform_5(%arg0: i32) -> (i32, i32) {
    %c0_i32 = arith.constant 0 : i32
    %c0_i32_0 = arith.constant 0 : i32
    return %arg0, %c0_i32 : i32, i32
  }
  func.func @transform_6(%arg0: i32) -> (i32, i32, i32) {
    %c0_i32 = arith.constant 0 : i32
    %c0_i32_0 = arith.constant 0 : i32
    %c0_i32_1 = arith.constant 0 : i32
    return %arg0, %c0_i32, %c0_i32_0 : i32, i32, i32
  }
  func.func @transform_7(%arg0: i32) -> (i32, i32, i32) {
    %c0_i32 = arith.constant 0 : i32
    %c0_i32_0 = arith.constant 0 : i32
    %c0_i32_1 = arith.constant 0 : i32
    return %arg0, %c0_i32, %c0_i32_0 : i32, i32, i32
  }
}

</mosaic_0001>

<llo_original>
// kernel: simple_cnn_forward.1
$region0: #{simple_cnn_forward.1}
  #allocation0 [shape = 'u32[]', space=smem, size = 0x4, offset = 0x4, fixed_abs, tag = 'smem constant byte address 0x4 - core index']
  #allocation1 [shape = 'u32[144,128]{1,0:T(1,128)}', space=vmem, size = 0x12000, scoped, tag = 'internal scratch']
  %s0 = inlined_call_operand.vmem [shape: f32[2,4,124], index: 0, kind: input, shape index: {}]
  %s1 = inlined_call_operand.vmem [shape: f32[16,3], index: 1, kind: input, shape index: {}]
  %s2 = inlined_call_operand.vmem [shape: f32[16,1], index: 2, kind: input, shape index: {}]
  %s3 = inlined_call_operand.vmem [shape: f32[32,48], index: 3, kind: input, shape index: {}]
  %s4 = inlined_call_operand.vmem [shape: f32[32,1], index: 4, kind: input, shape index: {}]
  %s5 = inlined_call_operand.hbm [shape: bf16[128,4096], index: 5, kind: input, shape index: {}]
  %s6 = inlined_call_operand.vmem [shape: f32[2,1,64], index: 6, kind: input, shape index: {}]
  %s7 = inlined_call_operand.vmem [shape: f32[2,2,64], index: 7, kind: output, shape index: {}]
  %s8 = sld [smem:[#allocation0]]
  $region65: #{simple_cnn_forward.1} parent=0
    _
  %s10 = ssub.s32 1, %s8
  %s11 = scalar_select 0, %s10, %s8
  $region1: #{simple_cnn_forward.1} parent=0
    #allocation2 [shape = 'u8[1048576]{0}', space=vmem, size = 0x100000, scoped, tag = 'input window, operand 5']
    #allocation3 [shape = 's32[2]{0}', space=sflag, size = 0x8, scoped, tag = 'scoped memory for simple_cnn_forward.1']
    %12 = vsyncpa [#allocation3], 0
    %s13 = scalar_lea.sflag [#allocation3], 1
    %14 = vsyncpa %s13, 0
    loop: start=0, step=1, limit=4
    $region2: #{simple_cnn_forward.1} parent=1 // loop_pre_header
      _
    $region3: #{simple_cnn_forward.1} parent=1 // loop_header
      %s16 = sphi 0, %s20
      %p17 = scmp.ge.s32.totalorder %s16, 4
      %s24 = sphi 0, %s24
      %s26 = sphi 0, %s24
      %s27 = sphi 0, %s26
      %s41 = sphi 0, %s27
      %s45 = sphi 0, %s45
      %s47 = sphi 0, %s45
      %s48 = sphi 0, %s47
      %s62 = sphi 0, %s48
      %s66 = sphi 0, %s66
      %s68 = sphi 0, %s66
      %s69 = sphi 0, %s68
      %s83 = sphi 0, %s69
      %s87 = sphi 0, %s87
      %s89 = sphi 0, %s87
      %s90 = sphi 0, %s89
      %s104 = sphi 0, %s90
      %s108 = sphi 0, %s108
      %s110 = sphi 0, %s108
      %s111 = sphi 0, %s110
      %s125 = sphi 0, %s111
      %s131 = sphi 0, %s133
      %s134 = sphi 0, %s131
      %s135 = sphi 0, %s134
      %s151 = sphi 0, %s135
      %s157 = sphi 0, %s159
      %s160 = sphi 0, %s157
      %s161 = sphi 0, %s160
      %s177 = sphi 0, %s161
      %s183 = sphi 0, %s185
      %s186 = sphi 0, %s183
      %s187 = sphi 0, %s186
      %s203 = sphi 0, %s187
    $region4: #{simple_cnn_forward.1} parent=1 // loop_header_branch
      %19 = sbr.rel (%p17) target = $region8
    $region5: #{simple_cnn_forward.1} parent=1 // loop_body
      %s21 = ssub.s32 %s16, 1
      %s22 = ssub.s32 %s16, 2
      %s23 = sadd.s32 %s16, 1
      %s25 = sadd.s32 %s24, 1
      %p28 = scmp.eq.s32.totalorder %s16, 1
      %p29 = scmp.ne.s32.totalorder %s24, %s26
      %p30 = scmp.eq.s32.totalorder %s16, 0
      %p31 = por %p29, %p30
      %p32 = scmp.ne.s32.totalorder %s24, %s26
      %p33 = scmp.eq.s32.totalorder %s21, 1
      %p34 = por %p32, %p33
      %p35 = scmp.ne.s32.totalorder %s26, %s27
      %p36 = scmp.eq.s32.totalorder %s21, 0
      %p37 = por %p35, %p36
      %p38 = scmp.ne.s32.totalorder %s26, %s27
      %p39 = scmp.eq.s32.totalorder %s22, 1
      %p40 = por %p38, %p39
      %p42 = scmp.ne.s32.totalorder %s27, %s41
      %p43 = scmp.eq.s32.totalorder %s22, 0
      %p44 = por %p42, %p43
      %s46 = sadd.s32 %s45, 1
      %p49 = scmp.eq.s32.totalorder %s16, 1
      %p50 = scmp.ne.s32.totalorder %s45, %s47
      %p51 = scmp.eq.s32.totalorder %s16, 0
      %p52 = por %p50, %p51
      %p53 = scmp.ne.s32.totalorder %s45, %s47
      %p54 = scmp.eq.s32.totalorder %s21, 1
      %p55 = por %p53, %p54
      %p56 = scmp.ne.s32.totalorder %s47, %s48
      %p57 = scmp.eq.s32.totalorder %s21, 0
      %p58 = por %p56, %p57
      %p59 = scmp.ne.s32.totalorder %s47, %s48
      %p60 = scmp.eq.s32.totalorder %s22, 1
      %p61 = por %p59, %p60
      %p63 = scmp.ne.s32.totalorder %s48, %s62
      %p64 = scmp.eq.s32.totalorder %s22, 0
      %p65 = por %p63, %p64
      %s67 = sadd.s32 %s66, 1
      %p70 = scmp.eq.s32.totalorder %s16, 1
      %p71 = scmp.ne.s32.totalorder %s66, %s68
      %p72 = scmp.eq.s32.totalorder %s16, 0
      %p73 = por %p71, %p72
      %p74 = scmp.ne.s32.totalorder %s66, %s68
      %p75 = scmp.eq.s32.totalorder %s21, 1
      %p76 = por %p74, %p75
      %p77 = scmp.ne.s32.totalorder %s68, %s69
      %p78 = scmp.eq.s32.totalorder %s21, 0
      %p79 = por %p77, %p78
      %p80 = scmp.ne.s32.totalorder %s68, %s69
      %p81 = scmp.eq.s32.totalorder %s22, 1
      %p82 = por %p80, %p81
      %p84 = scmp.ne.s32.totalorder %s69, %s83
      %p85 = scmp.eq.s32.totalorder %s22, 0
      %p86 = por %p84, %p85
      %s88 = sadd.s32 %s87, 1
      %p91 = scmp.eq.s32.totalorder %s16, 1
      %p92 = scmp.ne.s32.totalorder %s87, %s89
      %p93 = scmp.eq.s32.totalorder %s16, 0
      %p94 = por %p92, %p93
      %p95 = scmp.ne.s32.totalorder %s87, %s89
      %p96 = scmp.eq.s32.totalorder %s21, 1
      %p97 = por %p95, %p96
      %p98 = scmp.ne.s32.totalorder %s89, %s90
      %p99 = scmp.eq.s32.totalorder %s21, 0
      %p100 = por %p98, %p99
      %p101 = scmp.ne.s32.totalorder %s89, %s90
      %p102 = scmp.eq.s32.totalorder %s22, 1
      %p103 = por %p101, %p102
      %p105 = scmp.ne.s32.totalorder %s90, %s104
      %p106 = scmp.eq.s32.totalorder %s22, 0
      %p107 = por %p105, %p106
      %s109 = sadd.s32 %s108, 1
      %p112 = scmp.eq.s32.totalorder %s16, 1
      %p113 = scmp.ne.s32.totalorder %s108, %s110
      %p114 = scmp.eq.s32.totalorder %s16, 0
      %p115 = por %p113, %p114
      %p116 = scmp.ne.s32.totalorder %s108, %s110
      %p117 = scmp.eq.s32.totalorder %s21, 1
      %p118 = por %p116, %p117
      %p119 = scmp.ne.s32.totalorder %s110, %s111
      %p120 = scmp.eq.s32.totalorder %s21, 0
      %p121 = por %p119, %p120
      %p122 = scmp.ne.s32.totalorder %s110, %s111
      %p123 = scmp.eq.s32.totalorder %s22, 1
      %p124 = por %p122, %p123
      %p126 = scmp.ne.s32.totalorder %s111, %s125
      %p127 = scmp.eq.s32.totalorder %s22, 0
      %p128 = por %p126, %p127
      %s129 = ssub.s32 %s16, %s23
      %p130 = scmp.eq.s32.totalorder %s129, 0
      %s132 = sadd.s32 %s131, 1
      %s133 = scalar_select %p130, %s131, %s132
      %p136 = pneg %p130
      %p137 = scmp.eq.s32.totalorder %s16, 1
      %p138 = por %p136, %p137
      %p139 = scmp.ne.s32.totalorder %s131, %s134
      %p140 = scmp.eq.s32.totalorder %s16, 0
      %p141 = por %p139, %p140
      %p142 = scmp.ne.s32.totalorder %s131, %s134
      %p143 = scmp.eq.s32.totalorder %s21, 1
      %p144 = por %p142, %p143
      %p145 = scmp.ne.s32.totalorder %s134, %s135
      %p146 = scmp.eq.s32.totalorder %s21, 0
      %p147 = por %p145, %p146
      %p148 = scmp.ne.s32.totalorder %s134, %s135
      %p149 = scmp.eq.s32.totalorder %s22, 1
      %p150 = por %p148, %p149
      %p152 = scmp.ne.s32.totalorder %s135, %s151
      %p153 = scmp.eq.s32.totalorder %s22, 0
      %p154 = por %p152, %p153
      %s155 = ssub.s32 %s16, %s23
      %p156 = scmp.eq.s32.totalorder %s155, 0
      %s158 = sadd.s32 %s157, 1
      %s159 = scalar_select %p156, %s157, %s158
      %p162 = pneg %p156
      %p163 = scmp.eq.s32.totalorder %s16, 1
      %p164 = por %p162, %p163
      %p165 = scmp.ne.s32.totalorder %s157, %s160
      %p166 = scmp.eq.s32.totalorder %s16, 0
      %p167 = por %p165, %p166
      %p168 = scmp.ne.s32.totalorder %s157, %s160
      %p169 = scmp.eq.s32.totalorder %s21, 1
      %p170 = por %p168, %p169
      %p171 = scmp.ne.s32.totalorder %s160, %s161
      %p172 = scmp.eq.s32.totalorder %s21, 0
      %p173 = por %p171, %p172
      %p174 = scmp.ne.s32.totalorder %s160, %s161
      %p175 = scmp.eq.s32.totalorder %s22, 1
      %p176 = por %p174, %p175
      %p178 = scmp.ne.s32.totalorder %s161, %s177
      %p179 = scmp.eq.s32.totalorder %s22, 0
      %p180 = por %p178, %p179
      %s181 = ssub.s32 %s16, %s23
      %p182 = scmp.eq.s32.totalorder %s181, 0
      %s184 = sadd.s32 %s183, 1
      %s185 = scalar_select %p182, %s183, %s184
      %p188 = pneg %p182
      %p189 = scmp.eq.s32.totalorder %s16, 1
      %p190 = por %p188, %p189
      %p191 = scmp.ne.s32.totalorder %s183, %s186
      %p192 = scmp.eq.s32.totalorder %s16, 0
      %p193 = por %p191, %p192
      %p194 = scmp.ne.s32.totalorder %s183, %s186
      %p195 = scmp.eq.s32.totalorder %s21, 1
      %p196 = por %p194, %p195
      %p197 = scmp.ne.s32.totalorder %s186, %s187
      %p198 = scmp.eq.s32.totalorder %s21, 0
      %p199 = por %p197, %p198
      %p200 = scmp.ne.s32.totalorder %s186, %s187
      %p201 = scmp.eq.s32.totalorder %s22, 1
      %p202 = por %p200, %p201
      %p204 = scmp.ne.s32.totalorder %s187, %s203
      %p205 = scmp.eq.s32.totalorder %s22, 0
      %p206 = por %p204, %p205
      %p207 = scmp.le.s32.totalorder 1, %s16
      %p208 = scmp.lt.s32.totalorder %s16, 3
      %p209 = pnand %p207, %p208
      %p210 = pneg %p209
      // Predicated region
      $region9: #{simple_cnn_forward.1} parent=5 // pred_check
        _
      $region10: #{simple_cnn_forward.1} parent=5 // pred_check_branch
        %212 = sbr.rel (%p209) target = $region12
      $region11: #{simple_cnn_forward.1} parent=5 // pred_region
        %s213 = ssub.s32 %s16, 1
        // Predicated region
        $region13: #{simple_cnn_forward.1} parent=11 // pred_check
          %p214 = pneg %p37
        $region14: #{simple_cnn_forward.1} parent=11 // pred_check_branch
          %216 = sbr.rel (%p214) target = $region16
        $region15: #{simple_cnn_forward.1} parent=11 // pred_region
          _
        $region16: #{simple_cnn_forward.1} parent=11 // pred_fallthru
          _
        // Predicated region
        $region17: #{simple_cnn_forward.1} parent=11 // pred_check
          %p217 = pneg %p58
        $region18: #{simple_cnn_forward.1} parent=11 // pred_check_branch
          %219 = sbr.rel (%p217) target = $region20
        $region19: #{simple_cnn_forward.1} parent=11 // pred_region
          _
        $region20: #{simple_cnn_forward.1} parent=11 // pred_fallthru
          _
        // Predicated region
        $region21: #{simple_cnn_forward.1} parent=11 // pred_check
          %p220 = pneg %p79
        $region22: #{simple_cnn_forward.1} parent=11 // pred_check_branch
          %222 = sbr.rel (%p220) target = $region24
        $region23: #{simple_cnn_forward.1} parent=11 // pred_region
          _
        $region24: #{simple_cnn_forward.1} parent=11 // pred_fallthru
          _
        // Predicated region
        $region25: #{simple_cnn_forward.1} parent=11 // pred_check
          %p223 = pneg %p100
        $region26: #{simple_cnn_forward.1} parent=11 // pred_check_branch
          %225 = sbr.rel (%p223) target = $region28
        $region27: #{simple_cnn_forward.1} parent=11 // pred_region
          _
        $region28: #{simple_cnn_forward.1} parent=11 // pred_fallthru
          _
        // Predicated region
        $region29: #{simple_cnn_forward.1} parent=11 // pred_check
          %p226 = pneg %p121
        $region30: #{simple_cnn_forward.1} parent=11 // pred_check_branch
          %228 = sbr.rel (%p226) target = $region32
        $region31: #{simple_cnn_forward.1} parent=11 // pred_region
          _
        $region32: #{simple_cnn_forward.1} parent=11 // pred_fallthru
          _
      $region12: #{simple_cnn_forward.1} parent=5 // pred_fallthru
        _
      %p229 = scmp.lt.s32.totalorder %s16, 2
      // Predicated region
      $region33: #{simple_cnn_forward.1} parent=5 // pred_check
        %p230 = pneg %p229
      $region34: #{simple_cnn_forward.1} parent=5 // pred_check_branch
        %232 = sbr.rel (%p230) target = $region36
      $region35: #{simple_cnn_forward.1} parent=5 // pred_region
        // Predicated region
        $region37: #{simple_cnn_forward.1} parent=35 // pred_check
          %p233 = pneg %p141
        $region38: #{simple_cnn_forward.1} parent=35 // pred_check_branch
          %235 = sbr.rel (%p233) target = $region40
        $region39: #{simple_cnn_forward.1} parent=35 // pred_region
          %s236 = sand.u32 %s131, 1
          %s237 = scalar_lea.sflag [#allocation3], %s236
          %s238 = sand.u32 %s131, 1
          %s239 = smul.addr %s238, 1024
          %s240 = scalar_lea.vmem [#allocation2], %s239
          %s241 = smul.u32 8, %s16
          %s243 = ssub.s32 16384, 16384
          %244 = vsyncadd %s237, %s243
          %s245 = smul.addr %s241, 32
          %s246 = smul.addr %s245, 64
          %s247 = scalar_lea.hbm %s5, %s246
          %s248 = sshll.u32 %s240, 4
          %s249 = int_to_ptr.vmem [resolvable:$true] %s248
          %254 = dma.hbm_to_vmem [thread:$0]  %s247, 16384, %s249, %s237, 2048, 2048, 128
        $region40: #{simple_cnn_forward.1} parent=35 // pred_fallthru
          _
        // Predicated region
        $region41: #{simple_cnn_forward.1} parent=35 // pred_check
          %p255 = pneg %p167
        $region42: #{simple_cnn_forward.1} parent=35 // pred_check_branch
          %257 = sbr.rel (%p255) target = $region44
        $region43: #{simple_cnn_forward.1} parent=35 // pred_region
          %p258 = scmp.lt.s32.totalorder %s16, 1
          %s259 = scalar_select %p258, %s16, 1
          %s260 = scalar_lea.vmem %s6, %s259
        $region44: #{simple_cnn_forward.1} parent=35 // pred_fallthru
          _
      $region36: #{simple_cnn_forward.1} parent=5 // pred_fallthru
        _
      %p261 = scmp.le.s32.totalorder 1, %s16
      %p262 = scmp.lt.s32.totalorder %s16, 3
      %p263 = pnand %p261, %p262
      %p264 = pneg %p263
      // Predicated region
      $region45: #{simple_cnn_forward.1} parent=5 // pred_check
        _
      $region46: #{simple_cnn_forward.1} parent=5 // pred_check_branch
        %266 = sbr.rel (%p263) target = $region48
      $region47: #{simple_cnn_forward.1} parent=5 // pred_region
        %s267 = ssub.s32 %s16, 1
        %s268 = sand.u32 %s134, 1
        %s269 = scalar_lea.sflag [#allocation3], %s268
        %s270 = sand.u32 %s134, 1
        %s271 = smul.addr %s270, 1024
        %s272 = scalar_lea.vmem [#allocation2], %s271
        // Predicated region
        $region49: #{simple_cnn_forward.1} parent=47 // pred_check
          %p273 = pneg %p147
        $region50: #{simple_cnn_forward.1} parent=47 // pred_check_branch
          %275 = sbr.rel (%p273) target = $region52
        $region51: #{simple_cnn_forward.1} parent=47 // pred_region
          %276 = dma.done %s269, 16384
        $region52: #{simple_cnn_forward.1} parent=47 // pred_fallthru
          _
        %p277 = pneg %p37
        %p278 = pneg %p34
        %p279 = pneg %p58
        %p280 = pneg %p55
        %p281 = pneg %p79
        %p282 = pneg %p76
        %p283 = pneg %p100
        %p284 = pneg %p97
        %p285 = pneg %p121
        %p286 = pneg %p118
        %s287 = sand.u32 %s134, 1
        %s288 = scalar_lea.sflag [#allocation3], %s287
        %s289 = sand.u32 %s134, 1
        %s290 = smul.addr %s289, 1024
        %s291 = scalar_lea.vmem [#allocation2], %s290
        %p292 = pneg %p147
        %p293 = pneg %p144
        %p294 = scmp.lt.s32.totalorder %s21, 1
        %s295 = scalar_select %p294, %s21, 1
        %s296 = scalar_lea.vmem %s6, %s295
        %p297 = pneg %p173
        %p298 = pneg %p170
        %p299 = pneg %p199
        %p300 = pneg %p196
        %p301 = scmp.lt.s32.totalorder %s21, 1
        %s302 = scalar_select %p301, %s21, 1
        %s303 = smul.addr %s302, 2
        %s304 = scalar_lea.vmem %s7, %s303
        %s305 = smul.u32 8, %s21
        %p306 = scmp.lt.s32.totalorder %s21, 1
        %s307 = scalar_select %p306, %s21, 1
        %s308 = scalar_lea.vmem %s6, %s307
        %p309 = scmp.lt.s32.totalorder %s21, 1
        %s310 = scalar_select %p309, %s21, 1
        %s311 = smul.addr %s310, 2
        %s312 = scalar_lea.vmem %s7, %s311
        %v314 = vld [vmem:[%s0] sm:$0xf]
        %s315 = scalar_lea.vmem %s0, 4
        %v316 = vld [vmem:[%s315] sm:$0xf]
        %318 = vrot.lane.b32.xlu0 %v316, 123
        %v319 = vpop.permute.xlu0 %318
        %vm321 = vcmask 1006592
        %v322 = vsel %vm321, %v314, %v319
        %324 = vrot.lane.b32.xlu0 %v314, 127
        %v325 = vpop.permute.xlu0 %324
        %327 = vrot.lane.b32.xlu0 %v316, 122
        %v328 = vpop.permute.xlu0 %327
        %v330 = vsel %vm321, %v325, %v328
        %v331 = vld [vmem:[%s1] sm:$0xff]
        %v332 = vld [vmem:[%s1 + $0x8] sm:$0xff]
        %v333 = vld [vmem:[%s2] sm:$0xff]
        %v334 = vld [vmem:[%s2 + $0x8] sm:$0xff]
        %336 = vset.pattern.permute.xlu0 0
        %337 = vperm.xlu0 %336, %v331
        %v338 = vpop.permute.xlu0 %337
        %341 = vset.pattern.permute.xlu0 0
        %342 = vperm.xlu0 %341, %v332
        %v343 = vpop.permute.xlu0 %342
        %v345 = vlaneseq
        %v346 = vshrl.u32 %v345, 7
        %v347 = vsub.s32 0, %v346
        %v348 = vrot.slane %v322, %v347
        %v349 = vlaneseq
        %v350 = vshrl.u32 %v349, 7
        %v351 = vsub.s32 0, %v350
        %v352 = vrot.slane %v319, %v351
        %v353 = vmul.f32 %v338, %v348
        %v354 = vmul.f32 %v338, %v352
        %v355 = vmul.f32 %v343, %v348
        %v356 = vmul.f32 %v343, %v352
        %357 = vset.pattern.permute.xlu0 1
        %358 = vperm.xlu0 %357, %v331
        %v359 = vpop.permute.xlu0 %358
        %361 = vset.pattern.permute.xlu0 1
        %362 = vperm.xlu0 %361, %v332
        %v363 = vpop.permute.xlu0 %362
        %v365 = vlaneseq
        %v366 = vshrl.u32 %v365, 7
        %v367 = vsub.s32 1, %v366
        %v368 = vrot.slane %v322, %v367
        %v369 = vlaneseq
        %v370 = vshrl.u32 %v369, 7
        %v371 = vsub.s32 1, %v370
        %v372 = vrot.slane %v319, %v371
        %v373 = vmul.f32 %v359, %v368
        %v374 = vmul.f32 %v359, %v372
        %v375 = vmul.f32 %v363, %v368
        %v376 = vmul.f32 %v363, %v372
        %v377 = vadd.f32 %v353, %v373
        %v378 = vadd.f32 %v354, %v374
        %v379 = vadd.f32 %v355, %v375
        %v380 = vadd.f32 %v356, %v376
        %381 = vset.pattern.permute.xlu0 2
        %382 = vperm.xlu0 %381, %v331
        %v383 = vpop.permute.xlu0 %382
        %385 = vset.pattern.permute.xlu0 2
        %386 = vperm.xlu0 %385, %v332
        %v387 = vpop.permute.xlu0 %386
        %v389 = vlaneseq
        %v390 = vshrl.u32 %v389, 7
        %v391 = vsub.s32 2, %v390
        %v392 = vrot.slane %v322, %v391
        %v393 = vlaneseq
        %v394 = vshrl.u32 %v393, 7
        %v395 = vsub.s32 2, %v394
        %v396 = vrot.slane %v319, %v395
        %v397 = vmul.f32 %v383, %v392
        %v398 = vmul.f32 %v383, %v396
        %v399 = vmul.f32 %v387, %v392
        %v400 = vmul.f32 %v387, %v396
        %v401 = vadd.f32 %v377, %v397
        %v402 = vadd.f32 %v378, %v398
        %v403 = vadd.f32 %v379, %v399
        %v404 = vadd.f32 %v380, %v400
        %406 = vset.pattern.permute.xlu0 0
        %407 = vperm.xlu0 %406, %v333
        %v408 = vpop.permute.xlu0 %407
        %411 = vset.pattern.permute.xlu0 0
        %412 = vperm.xlu0 %411, %v334
        %v413 = vpop.permute.xlu0 %412
        %v415 = vadd.f32 %v401, %v408
        %v416 = vadd.f32 %v402, %v408
        %v417 = vadd.f32 %v403, %v413
        %v418 = vadd.f32 %v404, %v413
        %v419 = vmul.f32 %v338, %v368
        %v420 = vmul.f32 %v338, %v372
        %v421 = vmul.f32 %v343, %v368
        %v422 = vmul.f32 %v343, %v372
        %v423 = vmul.f32 %v359, %v392
        %v424 = vmul.f32 %v359, %v396
        %v425 = vmul.f32 %v363, %v392
        %v426 = vmul.f32 %v363, %v396
        %v427 = vadd.f32 %v419, %v423
        %v428 = vadd.f32 %v420, %v424
        %v429 = vadd.f32 %v421, %v425
        %v430 = vadd.f32 %v422, %v426
        %v431 = vlaneseq
        %v432 = vshrl.u32 %v431, 7
        %v433 = vsub.s32 3, %v432
        %v434 = vrot.slane %v322, %v433
        %v435 = vlaneseq
        %v436 = vshrl.u32 %v435, 7
        %v437 = vsub.s32 3, %v436
        %v438 = vrot.slane %v319, %v437
        %v439 = vmul.f32 %v383, %v434
        %v440 = vmul.f32 %v383, %v438
        %v441 = vmul.f32 %v387, %v434
        %v442 = vmul.f32 %v387, %v438
        %v443 = vadd.f32 %v427, %v439
        %v444 = vadd.f32 %v428, %v440
        %v445 = vadd.f32 %v429, %v441
        %v446 = vadd.f32 %v430, %v442
        %v447 = vadd.f32 %v443, %v408
        %v448 = vadd.f32 %v444, %v408
        %v449 = vadd.f32 %v445, %v413
        %v450 = vadd.f32 %v446, %v413
        %v451 = vmul.f32 %v338, %v392
        %v452 = vmul.f32 %v338, %v396
        %v453 = vmul.f32 %v343, %v392
        %v454 = vmul.f32 %v343, %v396
        %v455 = vmul.f32 %v359, %v434
        %v456 = vmul.f32 %v359, %v438
        %v457 = vmul.f32 %v363, %v434
        %v458 = vmul.f32 %v363, %v438
        %v459 = vadd.f32 %v451, %v455
        %v460 = vadd.f32 %v452, %v456
        %v461 = vadd.f32 %v453, %v457
        %v462 = vadd.f32 %v454, %v458
        %v463 = vlaneseq
        %v464 = vshrl.u32 %v463, 7
        %v465 = vsub.s32 0, %v464
        %v466 = vrot.slane %v330, %v465
        %v467 = vlaneseq
        %v468 = vshrl.u32 %v467, 7
        %v469 = vsub.s32 0, %v468
        %v470 = vrot.slane %v328, %v469
        %v471 = vmul.f32 %v383, %v466
        %v472 = vmul.f32 %v383, %v470
        %v473 = vmul.f32 %v387, %v466
        %v474 = vmul.f32 %v387, %v470
        %v475 = vadd.f32 %v459, %v471
        %v476 = vadd.f32 %v460, %v472
        %v477 = vadd.f32 %v461, %v473
        %v478 = vadd.f32 %v462, %v474
        %v479 = vadd.f32 %v475, %v408
        %v480 = vadd.f32 %v476, %v408
        %v481 = vadd.f32 %v477, %v413
        %v482 = vadd.f32 %v478, %v413
        %v483 = vmul.f32 %v338, %v434
        %v484 = vmul.f32 %v338, %v438
        %v485 = vmul.f32 %v343, %v434
        %v486 = vmul.f32 %v343, %v438
        %v487 = vmul.f32 %v359, %v466
        %v488 = vmul.f32 %v359, %v470
        %v489 = vmul.f32 %v363, %v466
        %v490 = vmul.f32 %v363, %v470
        %v491 = vadd.f32 %v483, %v487
        %v492 = vadd.f32 %v484, %v488
        %v493 = vadd.f32 %v485, %v489
        %v494 = vadd.f32 %v486, %v490
        %v495 = vlaneseq
        %v496 = vshrl.u32 %v495, 7
        %v497 = vsub.s32 1, %v496
        %v498 = vrot.slane %v330, %v497
        %v499 = vlaneseq
        %v500 = vshrl.u32 %v499, 7
        %v501 = vsub.s32 1, %v500
        %v502 = vrot.slane %v328, %v501
        %v503 = vmul.f32 %v383, %v498
        %v504 = vmul.f32 %v383, %v502
        %v505 = vmul.f32 %v387, %v498
        %v506 = vmul.f32 %v387, %v502
        %v507 = vadd.f32 %v491, %v503
        %v508 = vadd.f32 %v492, %v504
        %v509 = vadd.f32 %v493, %v505
        %v510 = vadd.f32 %v494, %v506
        %v511 = vadd.f32 %v507, %v408
        %v512 = vadd.f32 %v508, %v408
        %v513 = vadd.f32 %v509, %v413
        %v514 = vadd.f32 %v510, %v413
        %v515 = vmax.f32 %v415, %v447
        %v516 = vmax.f32 %v416, %v448
        %v517 = vmax.f32 %v417, %v449
        %v518 = vmax.f32 %v418, %v450
        %v519 = vmax.f32 %v515, 0.0
        %v520 = vmax.f32 %v516, 0.0
        %v521 = vmax.f32 %v517, 0.0
        %v522 = vmax.f32 %v518, 0.0
        %v523 = vmax.f32 %v479, %v511
        %v524 = vmax.f32 %v480, %v512
        %v525 = vmax.f32 %v481, %v513
        %v526 = vmax.f32 %v482, %v514
        %v527 = vmax.f32 %v523, 0.0
        %v528 = vmax.f32 %v524, 0.0
        %v529 = vmax.f32 %v525, 0.0
        %v530 = vmax.f32 %v526, 0.0
        %533 = vrot.lane.b32.xlu0 %v527, 122
        %v534 = vpop.permute.xlu0 %533
        %535 = vrot.lane.b32.xlu0 %v529, 122
        %v536 = vpop.permute.xlu0 %535
        %543 = vrot.lane.b32.xlu0 %v519, 121
        %v544 = vpop.permute.xlu0 %543
        %545 = vrot.lane.b32.xlu0 %v520, 121
        %v546 = vpop.permute.xlu0 %545
        %547 = vrot.lane.b32.xlu0 %v521, 121
        %v548 = vpop.permute.xlu0 %547
        %549 = vrot.lane.b32.xlu0 %v522, 121
        %v550 = vpop.permute.xlu0 %549
        %vm551 = vcmask 990208
        %v552 = vsel %vm551, %v544, %v546
        %v553 = vsel %vm551, %v548, %v550
        %560 = vrot.lane.b32.xlu0 %v527, 115
        %v561 = vpop.permute.xlu0 %560
        %562 = vrot.lane.b32.xlu0 %v528, 115
        %v563 = vpop.permute.xlu0 %562
        %564 = vrot.lane.b32.xlu0 %v529, 115
        %v565 = vpop.permute.xlu0 %564
        %566 = vrot.lane.b32.xlu0 %v530, 115
        %v567 = vpop.permute.xlu0 %566
        %vm568 = vcmask 941056
        %v569 = vsel %vm568, %v561, %v563
        %v570 = vsel %vm568, %v565, %v567
        %vm575 = vcmask 998400
        %v576 = vsel %vm575, %v519, %v534
        %v577 = vsel %vm575, %v521, %v536
        %vm578 = vcmask 949248
        %v579 = vsel %vm578, %v534, %v552
        %v580 = vsel %vm578, %v536, %v553
        %vm581 = vcmask 900096
        %v582 = vsel %vm581, %v546, %v569
        %v583 = vsel %vm581, %v550, %v570
        %586 = vrot.lane.b32.xlu0 %v527, 121
        %v587 = vpop.permute.xlu0 %586
        %588 = vrot.lane.b32.xlu0 %v528, 121
        %v589 = vpop.permute.xlu0 %588
        %590 = vrot.lane.b32.xlu0 %v529, 121
        %v591 = vpop.permute.xlu0 %590
        %592 = vrot.lane.b32.xlu0 %v530, 121
        %v593 = vpop.permute.xlu0 %592
        %v594 = vsel %vm551, %v587, %v589
        %v595 = vsel %vm551, %v591, %v593
        %600 = vrot.lane.b32.xlu0 %v519, 114
        %v601 = vpop.permute.xlu0 %600
        %602 = vrot.lane.b32.xlu0 %v520, 114
        %v603 = vpop.permute.xlu0 %602
        %604 = vrot.lane.b32.xlu0 %v521, 114
        %v605 = vpop.permute.xlu0 %604
        %606 = vrot.lane.b32.xlu0 %v522, 114
        %v607 = vpop.permute.xlu0 %606
        %vm608 = vcmask 932864
        %v609 = vsel %vm608, %v601, %v603
        %v610 = vsel %vm608, %v605, %v607
        %v615 = vsel %vm575, %v527, %v544
        %v616 = vsel %vm575, %v529, %v548
        %v617 = vsel %vm578, %v544, %v594
        %v618 = vsel %vm578, %v548, %v595
        %v619 = vsel %vm581, %v589, %v609
        %v620 = vsel %vm581, %v593, %v610
        %621 = vrot.lane.b32.xlu0 %v519, 127
        %v622 = vpop.permute.xlu0 %621
        %623 = vrot.lane.b32.xlu0 %v521, 127
        %v624 = vpop.permute.xlu0 %623
        %629 = vrot.lane.b32.xlu0 %v519, 120
        %v630 = vpop.permute.xlu0 %629
        %631 = vrot.lane.b32.xlu0 %v520, 120
        %v632 = vpop.permute.xlu0 %631
        %633 = vrot.lane.b32.xlu0 %v521, 120
        %v634 = vpop.permute.xlu0 %633
        %635 = vrot.lane.b32.xlu0 %v522, 120
        %v636 = vpop.permute.xlu0 %635
        %vm637 = vcmask 982016
        %v638 = vsel %vm637, %v630, %v632
        %v639 = vsel %vm637, %v634, %v636
        %644 = vrot.lane.b32.xlu0 %v527, 114
        %v645 = vpop.permute.xlu0 %644
        %646 = vrot.lane.b32.xlu0 %v528, 114
        %v647 = vpop.permute.xlu0 %646
        %648 = vrot.lane.b32.xlu0 %v529, 114
        %v649 = vpop.permute.xlu0 %648
        %650 = vrot.lane.b32.xlu0 %v530, 114
        %v651 = vpop.permute.xlu0 %650
        %v652 = vsel %vm608, %v645, %v647
        %v653 = vsel %vm608, %v649, %v651
        %v658 = vsel %vm575, %v622, %v587
        %v659 = vsel %vm575, %v624, %v591
        %v660 = vsel %vm578, %v587, %v638
        %v661 = vsel %vm578, %v591, %v639
        %v662 = vsel %vm581, %v632, %v652
        %v663 = vsel %vm581, %v636, %v653
        %v664 = vld [vmem:[%s3] sm:$0xff]
        %v665 = vld [vmem:[%s3 + $0x8] sm:$0xff]
        %v666 = vld [vmem:[%s3 + $0x10] sm:$0xff]
        %v667 = vld [vmem:[%s3 + $0x18] sm:$0xff]
        %v668 = vld [vmem:[%s4] sm:$0xff]
        %v669 = vld [vmem:[%s4 + $0x8] sm:$0xff]
        %v670 = vld [vmem:[%s4 + $0x10] sm:$0xff]
        %v671 = vld [vmem:[%s4 + $0x18] sm:$0xff]
        %673 = vset.pattern.permute.xlu0 0
        %674 = vperm.xlu0 %673, %v668
        %v675 = vpop.permute.xlu0 %674
        %678 = vset.pattern.permute.xlu0 0
        %679 = vperm.xlu0 %678, %v669
        %v680 = vpop.permute.xlu0 %679
        %683 = vset.pattern.permute.xlu0 0
        %684 = vperm.xlu0 %683, %v670
        %v685 = vpop.permute.xlu0 %684
        %688 = vset.pattern.permute.xlu0 0
        %689 = vperm.xlu0 %688, %v671
        %v690 = vpop.permute.xlu0 %689
        %vm692 = vcmask 392192
        %v694 = vsel %vm692, %v664, 0
        %v697 = vsel %vm692, %v665, 0
        %v700 = vsel %vm692, %v666, 0
        %v703 = vsel %vm692, %v667, 0
        %705 = vmatprep.subr.mxu0 0.0
        %706 = vmatpush1.msra.mxu0 0.0
        %707 = vmatprep.subr.mxu0 0.0
        %708 = vmatpush1.msra.mxu0 0.0
        %709 = vmatprep.subr.mxu0 0.0
        %710 = vmatpush1.msra.mxu0 0.0
        %711 = vmatprep.subr.mxu0 0.0
        %712 = vmatpush1.msra.mxu0 0.0
        %713 = vmatprep.subr.mxu0 0.0
        %714 = vmatpush1.msra.mxu0 0.0
        %715 = vmatprep.subr.mxu0 0.0
        %716 = vmatpush1.msra.mxu0 0.0
        %717 = vmatprep.subr.mxu0 0.0
        %718 = vmatpush1.msra.mxu0 0.0
        %719 = vmatprep.subr.mxu0 0.0
        %720 = vmatpush1.msra.mxu0 0.0
        %721 = vmatprep.subr.mxu0 0.0
        %722 = vmatpush1.msra.mxu0 0.0
        %723 = vmatprep.subr.mxu0 0.0
        %724 = vmatpush1.msra.mxu0 0.0
        %725 = vmatprep.subr.mxu0 %v661
        %726 = vmatpush1.msra.mxu0 %v659
        %727 = vmatprep.subr.mxu0 %v660
        %728 = vmatpush1.msra.mxu0 %v658
        %729 = vmatprep.subr.mxu0 %v618
        %730 = vmatpush1.msra.mxu0 %v616
        %731 = vmatprep.subr.mxu0 %v617
        %732 = vmatpush1.msra.mxu0 %v615
        %733 = vmatprep.subr.mxu0 %v580
        %734 = vmatpush1.msra.mxu0 %v577
        %735 = vmatprep.subr.mxu0 %v579
        %736 = vmatpush1.msra.mxu0 %v576
        %737 = vmatprep.subr.mxu0 0.0
        %738 = vmatpush2.msra.mxu0 0.0
        %739 = vmatprep.subr.mxu0 0.0
        %740 = vmatpush2.msra.mxu0 0.0
        %741 = vmatprep.subr.mxu0 0.0
        %742 = vmatpush2.msra.mxu0 0.0
        %743 = vmatprep.subr.mxu0 0.0
        %744 = vmatpush2.msra.mxu0 0.0
        %745 = vmatprep.subr.mxu0 0.0
        %746 = vmatpush2.msra.mxu0 0.0
        %747 = vmatprep.subr.mxu0 0.0
        %748 = vmatpush2.msra.mxu0 0.0
        %749 = vmatprep.subr.mxu0 0.0
        %750 = vmatpush2.msra.mxu0 0.0
        %751 = vmatprep.subr.mxu0 0.0
        %752 = vmatpush2.msra.mxu0 0.0
        %753 = vmatprep.subr.mxu0 0.0
        %754 = vmatpush2.msra.mxu0 0.0
        %755 = vmatprep.subr.mxu0 0.0
        %756 = vmatpush2.msra.mxu0 0.0
        %757 = vmatprep.subr.mxu0 0.0
        %758 = vmatpush2.msra.mxu0 0.0
        %759 = vmatprep.subr.mxu0 0.0
        %760 = vmatpush2.msra.mxu0 0.0
        %761 = vmatprep.subr.mxu0 0.0
        %762 = vmatpush2.msra.mxu0 0.0
        %763 = vmatprep.subr.mxu0 0.0
        %764 = vmatpush2.msra.mxu0 0.0
        %765 = vmatprep.subr.mxu0 0.0
        %766 = vmatpush2.msra.mxu0 0.0
        %767 = vmatprep.subr.mxu0 0.0
        %768 = vmatpush2.msra.mxu0 0.0
        %769 = vmatprep.mubr.f32.mxu0 0.0
        %770 = vmatmul.mubr.f32.gmra.mxu0 %v694
        %v771 = vpop.f32.mrf.mxu0
        %v772 = vadd.f32 %v675, %v771
        %v773 = vpop.f32.mrf.mxu0
        %v774 = vadd.f32 %v675, %v773
        %775 = vmatprep.mubr.f32.mxu0 0.0
        %776 = vmatmul.mubr.f32.gmra.mxu0 %v697
        %v777 = vpop.f32.mrf.mxu0
        %v778 = vadd.f32 %v680, %v777
        %v779 = vpop.f32.mrf.mxu0
        %v780 = vadd.f32 %v680, %v779
        %781 = vmatprep.mubr.f32.mxu0 0.0
        %782 = vmatmul.mubr.f32.gmra.mxu0 %v700
        %v783 = vpop.f32.mrf.mxu0
        %v784 = vadd.f32 %v685, %v783
        %v785 = vpop.f32.mrf.mxu0
        %v786 = vadd.f32 %v685, %v785
        %787 = vmatprep.mubr.f32.mxu0 0.0
        %788 = vmatmul.mubr.f32.gmra.mxu0 %v703
        %v789 = vpop.f32.mrf.mxu0
        %v790 = vadd.f32 %v690, %v789
        %v791 = vpop.f32.mrf.mxu0
        %v792 = vadd.f32 %v690, %v791
        %793 = vdwg.mxu0
        %794 = vmatprep.subr.mxu0 0.0
        %795 = vmatpush1.msra.mxu0 0.0
        %796 = vmatprep.subr.mxu0 0.0
        %797 = vmatpush1.msra.mxu0 0.0
        %798 = vmatprep.subr.mxu0 0.0
        %799 = vmatpush1.msra.mxu0 0.0
        %800 = vmatprep.subr.mxu0 0.0
        %801 = vmatpush1.msra.mxu0 0.0
        %802 = vmatprep.subr.mxu0 0.0
        %803 = vmatpush1.msra.mxu0 0.0
        %804 = vmatprep.subr.mxu0 0.0
        %805 = vmatpush1.msra.mxu0 0.0
        %806 = vmatprep.subr.mxu0 0.0
        %807 = vmatpush1.msra.mxu0 0.0
        %808 = vmatprep.subr.mxu0 0.0
        %809 = vmatpush1.msra.mxu0 0.0
        %810 = vmatprep.subr.mxu0 0.0
        %811 = vmatpush1.msra.mxu0 0.0
        %812 = vmatprep.subr.mxu0 0.0
        %813 = vmatpush1.msra.mxu0 0.0
        %814 = vmatprep.subr.mxu0 %v651
        %815 = vmatpush1.msra.mxu0 %v663
        %816 = vmatprep.subr.mxu0 %v647
        %817 = vmatpush1.msra.mxu0 %v662
        %818 = vmatprep.subr.mxu0 %v607
        %819 = vmatpush1.msra.mxu0 %v620
        %820 = vmatprep.subr.mxu0 %v603
        %821 = vmatpush1.msra.mxu0 %v619
        %822 = vmatprep.subr.mxu0 %v567
        %823 = vmatpush1.msra.mxu0 %v583
        %824 = vmatprep.subr.mxu0 %v563
        %825 = vmatpush1.msra.mxu0 %v582
        %826 = vmatprep.subr.mxu0 0.0
        %827 = vmatpush2.msra.mxu0 0.0
        %828 = vmatprep.subr.mxu0 0.0
        %829 = vmatpush2.msra.mxu0 0.0
        %830 = vmatprep.subr.mxu0 0.0
        %831 = vmatpush2.msra.mxu0 0.0
        %832 = vmatprep.subr.mxu0 0.0
        %833 = vmatpush2.msra.mxu0 0.0
        %834 = vmatprep.subr.mxu0 0.0
        %835 = vmatpush2.msra.mxu0 0.0
        %836 = vmatprep.subr.mxu0 0.0
        %837 = vmatpush2.msra.mxu0 0.0
        %838 = vmatprep.subr.mxu0 0.0
        %839 = vmatpush2.msra.mxu0 0.0
        %840 = vmatprep.subr.mxu0 0.0
        %841 = vmatpush2.msra.mxu0 0.0
        %842 = vmatprep.subr.mxu0 0.0
        %843 = vmatpush2.msra.mxu0 0.0
        %844 = vmatprep.subr.mxu0 0.0
        %845 = vmatpush2.msra.mxu0 0.0
        %846 = vmatprep.subr.mxu0 0.0
        %847 = vmatpush2.msra.mxu0 0.0
        %848 = vmatprep.subr.mxu0 0.0
        %849 = vmatpush2.msra.mxu0 0.0
        %850 = vmatprep.subr.mxu0 0.0
        %851 = vmatpush2.msra.mxu0 0.0
        %852 = vmatprep.subr.mxu0 0.0
        %853 = vmatpush2.msra.mxu0 0.0
        %854 = vmatprep.subr.mxu0 0.0
        %855 = vmatpush2.msra.mxu0 0.0
        %856 = vmatprep.subr.mxu0 0.0
        %857 = vmatpush2.msra.mxu0 0.0
        %858 = vmatprep.mubr.f32.mxu0 0.0
        %859 = vmatmul.mubr.f32.gmra.mxu0 %v694
        %v860 = vpop.f32.mrf.mxu0
        %v861 = vadd.f32 %v675, %v860
        %v862 = vpop.f32.mrf.mxu0
        %v863 = vadd.f32 %v675, %v862
        %864 = vmatprep.mubr.f32.mxu0 0.0
        %865 = vmatmul.mubr.f32.gmra.mxu0 %v697
        %v866 = vpop.f32.mrf.mxu0
        %v867 = vadd.f32 %v680, %v866
        %v868 = vpop.f32.mrf.mxu0
        %v869 = vadd.f32 %v680, %v868
        %870 = vmatprep.mubr.f32.mxu0 0.0
        %871 = vmatmul.mubr.f32.gmra.mxu0 %v700
        %v872 = vpop.f32.mrf.mxu0
        %v873 = vadd.f32 %v685, %v872
        %v874 = vpop.f32.mrf.mxu0
        %v875 = vadd.f32 %v685, %v874
        %876 = vmatprep.mubr.f32.mxu0 0.0
        %877 = vmatmul.mubr.f32.gmra.mxu0 %v703
        %v878 = vpop.f32.mrf.mxu0
        %v879 = vadd.f32 %v690, %v878
        %v880 = vpop.f32.mrf.mxu0
        %v881 = vadd.f32 %v690, %v880
        %882 = vdwg.mxu0
        %891 = vrot.lane.b32.xlu0 %v772, 6
        %v892 = vpop.permute.xlu0 %891
        %893 = vrot.lane.b32.xlu0 %v774, 6
        %v894 = vpop.permute.xlu0 %893
        %895 = vrot.lane.b32.xlu0 %v778, 6
        %v896 = vpop.permute.xlu0 %895
        %897 = vrot.lane.b32.xlu0 %v780, 6
        %v898 = vpop.permute.xlu0 %897
        %899 = vrot.lane.b32.xlu0 %v784, 6
        %v900 = vpop.permute.xlu0 %899
        %901 = vrot.lane.b32.xlu0 %v786, 6
        %v902 = vpop.permute.xlu0 %901
        %903 = vrot.lane.b32.xlu0 %v790, 6
        %v904 = vpop.permute.xlu0 %903
        %905 = vrot.lane.b32.xlu0 %v792, 6
        %v906 = vpop.permute.xlu0 %905
        %vm907 = vcmask 48128
        %v908 = vsel %vm907, %v892, %v894
        %v909 = vsel %vm907, %v896, %v898
        %v910 = vsel %vm907, %v900, %v902
        %v911 = vsel %vm907, %v904, %v906
        %v916 = vmax.f32 %v772, %v908
        %v917 = vmax.f32 %v778, %v909
        %v918 = vmax.f32 %v784, %v910
        %v919 = vmax.f32 %v790, %v911
        %v920 = vmax.f32 %v916, 0.0
        %v921 = vmax.f32 %v917, 0.0
        %v922 = vmax.f32 %v918, 0.0
        %v923 = vmax.f32 %v919, 0.0
        %v924 = vsel %vm575, %v920, 0.0
        %v925 = vsel %vm575, %v921, 0.0
        %v926 = vsel %vm575, %v922, 0.0
        %v927 = vsel %vm575, %v923, 0.0
        %v928 = vpack.c.bf16 %v925, %v924
        %v929 = vpack.c.bf16 %v927, %v926
        %v931 = vshrl.u32 %v928, 16
        %v935 = vrot.slane %v928, 1
        %v937 = vrot.slane %v931, 1
        %v939 = vrot.slane %v928, 2
        %v941 = vrot.slane %v931, 2
        %v943 = vrot.slane %v928, 3
        %v945 = vrot.slane %v931, 3
        %v947 = vrot.slane %v928, 4
        %v949 = vrot.slane %v931, 4
        %v951 = vrot.slane %v928, 5
        %v953 = vrot.slane %v931, 5
        %v955 = vrot.slane %v928, 6
        %v957 = vrot.slane %v931, 6
        %v959 = vrot.slane %v928, 7
        %v961 = vrot.slane %v931, 7
        %v964 = vshrl.u32 %v929, 16
        %v968 = vrot.slane %v929, 1
        %v970 = vrot.slane %v964, 1
        %v972 = vrot.slane %v929, 2
        %v974 = vrot.slane %v964, 2
        %v976 = vrot.slane %v929, 3
        %v978 = vrot.slane %v964, 3
        %v980 = vrot.slane %v929, 4
        %v982 = vrot.slane %v964, 4
        %v984 = vrot.slane %v929, 5
        %v986 = vrot.slane %v964, 5
        %v988 = vrot.slane %v929, 6
        %v990 = vrot.slane %v964, 6
        %v992 = vrot.slane %v929, 7
        %v994 = vrot.slane %v964, 7
        %1004 = vrot.lane.b32.xlu0 %v861, 6
        %v1005 = vpop.permute.xlu0 %1004
        %1006 = vrot.lane.b32.xlu0 %v863, 6
        %v1007 = vpop.permute.xlu0 %1006
        %1008 = vrot.lane.b32.xlu0 %v867, 6
        %v1009 = vpop.permute.xlu0 %1008
        %1010 = vrot.lane.b32.xlu0 %v869, 6
        %v1011 = vpop.permute.xlu0 %1010
        %1012 = vrot.lane.b32.xlu0 %v873, 6
        %v1013 = vpop.permute.xlu0 %1012
        %1014 = vrot.lane.b32.xlu0 %v875, 6
        %v1015 = vpop.permute.xlu0 %1014
        %1016 = vrot.lane.b32.xlu0 %v879, 6
        %v1017 = vpop.permute.xlu0 %1016
        %1018 = vrot.lane.b32.xlu0 %v881, 6
        %v1019 = vpop.permute.xlu0 %1018
        %v1020 = vsel %vm907, %v1005, %v1007
        %v1021 = vsel %vm907, %v1009, %v1011
        %v1022 = vsel %vm907, %v1013, %v1015
        %v1023 = vsel %vm907, %v1017, %v1019
        %v1032 = vmax.f32 %v774, %v1005
        %v1033 = vmax.f32 %v861, %v1020
        %v1034 = vmax.f32 %v780, %v1009
        %v1035 = vmax.f32 %v867, %v1021
        %v1036 = vmax.f32 %v786, %v1013
        %v1037 = vmax.f32 %v873, %v1022
        %v1038 = vmax.f32 %v792, %v1017
        %v1039 = vmax.f32 %v879, %v1023
        %v1040 = vmax.f32 %v1032, 0.0
        %v1041 = vmax.f32 %v1033, 0.0
        %v1042 = vmax.f32 %v1034, 0.0
        %v1043 = vmax.f32 %v1035, 0.0
        %v1044 = vmax.f32 %v1036, 0.0
        %v1045 = vmax.f32 %v1037, 0.0
        %v1046 = vmax.f32 %v1038, 0.0
        %v1047 = vmax.f32 %v1039, 0.0
        %1056 = vrot.lane.b32.xlu0 %v1040, 12
        %v1057 = vpop.permute.xlu0 %1056
        %1058 = vrot.lane.b32.xlu0 %v1041, 12
        %v1059 = vpop.permute.xlu0 %1058
        %1060 = vrot.lane.b32.xlu0 %v1042, 12
        %v1061 = vpop.permute.xlu0 %1060
        %1062 = vrot.lane.b32.xlu0 %v1043, 12
        %v1063 = vpop.permute.xlu0 %1062
        %1064 = vrot.lane.b32.xlu0 %v1044, 12
        %v1065 = vpop.permute.xlu0 %1064
        %1066 = vrot.lane.b32.xlu0 %v1045, 12
        %v1067 = vpop.permute.xlu0 %1066
        %1068 = vrot.lane.b32.xlu0 %v1046, 12
        %v1069 = vpop.permute.xlu0 %1068
        %1070 = vrot.lane.b32.xlu0 %v1047, 12
        %v1071 = vpop.permute.xlu0 %1070
        %vm1072 = vcmask 97280
        %v1073 = vsel %vm1072, %v1057, %v1059
        %v1074 = vsel %vm1072, %v1061, %v1063
        %v1075 = vsel %vm1072, %v1065, %v1067
        %v1076 = vsel %vm1072, %v1069, %v1071
        %v1081 = vsel %vm575, %v1073, 0.0
        %v1082 = vsel %vm575, %v1074, 0.0
        %v1083 = vsel %vm575, %v1075, 0.0
        %v1084 = vsel %vm575, %v1076, 0.0
        %v1085 = vpack.c.bf16 %v1082, %v1081
        %v1086 = vpack.c.bf16 %v1084, %v1083
        %v1088 = vshrl.u32 %v1085, 16
        %v1091 = vrot.slane %v1085, 1
        %v1092 = vrot.slane %v1088, 1
        %v1093 = vrot.slane %v1085, 2
        %v1094 = vrot.slane %v1088, 2
        %v1095 = vrot.slane %v1085, 3
        %v1096 = vrot.slane %v1088, 3
        %v1097 = vrot.slane %v1085, 4
        %v1098 = vrot.slane %v1088, 4
        %v1099 = vrot.slane %v1085, 5
        %v1100 = vrot.slane %v1088, 5
        %v1101 = vrot.slane %v1085, 6
        %v1102 = vrot.slane %v1088, 6
        %v1103 = vrot.slane %v1085, 7
        %v1104 = vrot.slane %v1088, 7
        %v1106 = vshrl.u32 %v1086, 16
        %v1109 = vrot.slane %v1086, 1
        %v1110 = vrot.slane %v1106, 1
        %v1111 = vrot.slane %v1086, 2
        %v1112 = vrot.slane %v1106, 2
        %v1113 = vrot.slane %v1086, 3
        %v1114 = vrot.slane %v1106, 3
        %v1115 = vrot.slane %v1086, 4
        %v1116 = vrot.slane %v1106, 4
        %v1117 = vrot.slane %v1086, 5
        %v1118 = vrot.slane %v1106, 5
        %v1119 = vrot.slane %v1086, 6
        %v1120 = vrot.slane %v1106, 6
        %v1121 = vrot.slane %v1086, 7
        %v1122 = vrot.slane %v1106, 7
        %v1123 = vshll.u32 %v1085, 16
        %v1126 = vshll.u32 %v1088, 16
        %v1129 = vshll.u32 %v1091, 16
        %v1132 = vshll.u32 %v1092, 16
        %v1135 = vshll.u32 %v1093, 16
        %v1138 = vshll.u32 %v1094, 16
        %v1141 = vshll.u32 %v1095, 16
        %v1144 = vshll.u32 %v1096, 16
        %v1147 = vshll.u32 %v1097, 16
        %v1150 = vshll.u32 %v1098, 16
        %v1153 = vshll.u32 %v1099, 16
        %v1156 = vshll.u32 %v1100, 16
        %v1159 = vshll.u32 %v1101, 16
        %v1162 = vshll.u32 %v1102, 16
        %v1165 = vshll.u32 %v1103, 16
        %v1168 = vshll.u32 %v1104, 16
        %v1170 = vshll.u32 %v1086, 16
        %v1173 = vshll.u32 %v1106, 16
        %v1176 = vshll.u32 %v1109, 16
        %v1179 = vshll.u32 %v1110, 16
        %v1182 = vshll.u32 %v1111, 16
        %v1185 = vshll.u32 %v1112, 16
        %v1188 = vshll.u32 %v1113, 16
        %v1191 = vshll.u32 %v1114, 16
        %v1194 = vshll.u32 %v1115, 16
        %v1197 = vshll.u32 %v1116, 16
        %v1200 = vshll.u32 %v1117, 16
        %v1203 = vshll.u32 %v1118, 16
        %v1206 = vshll.u32 %v1119, 16
        %v1209 = vshll.u32 %v1120, 16
        %v1212 = vshll.u32 %v1121, 16
        %v1215 = vshll.u32 %v1122, 16
        %vm1249 = vcmask 1040384
        %vm1250 = vsmask.f32 256
        %vm1251 = vmand %vm1249, %vm1250
        %v1252 = vsel %vm1251, %v928, %v1123
        %v1253 = vsel %vm1251, %v931, %v1126
        %v1254 = vsel %vm1251, %v935, %v1129
        %v1255 = vsel %vm1251, %v937, %v1132
        %v1256 = vsel %vm1251, %v939, %v1135
        %v1257 = vsel %vm1251, %v941, %v1138
        %v1258 = vsel %vm1251, %v943, %v1141
        %v1259 = vsel %vm1251, %v945, %v1144
        %v1260 = vsel %vm1251, %v947, %v1147
        %v1261 = vsel %vm1251, %v949, %v1150
        %v1262 = vsel %vm1251, %v951, %v1153
        %v1263 = vsel %vm1251, %v953, %v1156
        %v1264 = vsel %vm1251, %v955, %v1159
        %v1265 = vsel %vm1251, %v957, %v1162
        %v1266 = vsel %vm1251, %v959, %v1165
        %v1267 = vsel %vm1251, %v961, %v1168
        %v1268 = vsel %vm1251, %v929, %v1170
        %v1269 = vsel %vm1251, %v964, %v1173
        %v1270 = vsel %vm1251, %v968, %v1176
        %v1271 = vsel %vm1251, %v970, %v1179
        %v1272 = vsel %vm1251, %v972, %v1182
        %v1273 = vsel %vm1251, %v974, %v1185
        %v1274 = vsel %vm1251, %v976, %v1188
        %v1275 = vsel %vm1251, %v978, %v1191
        %v1276 = vsel %vm1251, %v980, %v1194
        %v1277 = vsel %vm1251, %v982, %v1197
        %v1278 = vsel %vm1251, %v984, %v1200
        %v1279 = vsel %vm1251, %v986, %v1203
        %v1280 = vsel %vm1251, %v988, %v1206
        %v1281 = vsel %vm1251, %v990, %v1209
        %v1282 = vsel %vm1251, %v992, %v1212
        %v1283 = vsel %vm1251, %v994, %v1215
        %v1284 = vld [vmem:[%s272] sm:$0xff]
        %v1285 = vld [vmem:[%s272 + $0x8] sm:$0xff]
        %v1286 = vld [vmem:[%s272 + $0x10] sm:$0xff]
        %v1287 = vld [vmem:[%s272 + $0x18] sm:$0xff]
        %v1288 = vld [vmem:[%s272 + $0x20] sm:$0xff]
        %v1289 = vld [vmem:[%s272 + $0x28] sm:$0xff]
        %v1290 = vld [vmem:[%s272 + $0x30] sm:$0xff]
        %v1291 = vld [vmem:[%s272 + $0x38] sm:$0xff]
        %v1292 = vld [vmem:[%s272 + $0x40] sm:$0xff]
        %v1293 = vld [vmem:[%s272 + $0x48] sm:$0xff]
        %v1294 = vld [vmem:[%s272 + $0x50] sm:$0xff]
        %v1295 = vld [vmem:[%s272 + $0x58] sm:$0xff]
        %v1296 = vld [vmem:[%s272 + $0x60] sm:$0xff]
        %v1297 = vld [vmem:[%s272 + $0x68] sm:$0xff]
        %v1298 = vld [vmem:[%s272 + $0x70] sm:$0xff]
        %v1299 = vld [vmem:[%s272 + $0x78] sm:$0xff]
        %v1300 = vld [vmem:[%s272 + $0x80] sm:$0xff]
        %v1301 = vld [vmem:[%s272 + $0x88] sm:$0xff]
        %v1302 = vld [vmem:[%s272 + $0x90] sm:$0xff]
        %v1303 = vld [vmem:[%s272 + $0x98] sm:$0xff]
        %v1304 = vld [vmem:[%s272 + $0xa0] sm:$0xff]
        %v1305 = vld [vmem:[%s272 + $0xa8] sm:$0xff]
        %v1306 = vld [vmem:[%s272 + $0xb0] sm:$0xff]
        %v1307 = vld [vmem:[%s272 + $0xb8] sm:$0xff]
        %v1308 = vld [vmem:[%s272 + $0xc0] sm:$0xff]
        %v1309 = vld [vmem:[%s272 + $0xc8] sm:$0xff]
        %v1310 = vld [vmem:[%s272 + $0xd0] sm:$0xff]
        %v1311 = vld [vmem:[%s272 + $0xd8] sm:$0xff]
        %v1312 = vld [vmem:[%s272 + $0xe0] sm:$0xff]
        %v1313 = vld [vmem:[%s272 + $0xe8] sm:$0xff]
        %v1314 = vld [vmem:[%s272 + $0xf0] sm:$0xff]
        %v1315 = vld [vmem:[%s272 + $0xf8] sm:$0xff]
        %v1316 = vld [vmem:[%s272 + $0x100] sm:$0xff]
        %v1317 = vld [vmem:[%s272 + $0x108] sm:$0xff]
        %v1318 = vld [vmem:[%s272 + $0x110] sm:$0xff]
        %v1319 = vld [vmem:[%s272 + $0x118] sm:$0xff]
        %v1320 = vld [vmem:[%s272 + $0x120] sm:$0xff]
        %v1321 = vld [vmem:[%s272 + $0x128] sm:$0xff]
        %v1322 = vld [vmem:[%s272 + $0x130] sm:$0xff]
        %v1323 = vld [vmem:[%s272 + $0x138] sm:$0xff]
        %v1324 = vld [vmem:[%s272 + $0x140] sm:$0xff]
        %v1325 = vld [vmem:[%s272 + $0x148] sm:$0xff]
        %v1326 = vld [vmem:[%s272 + $0x150] sm:$0xff]
        %v1327 = vld [vmem:[%s272 + $0x158] sm:$0xff]
        %v1328 = vld [vmem:[%s272 + $0x160] sm:$0xff]
        %v1329 = vld [vmem:[%s272 + $0x168] sm:$0xff]
        %v1330 = vld [vmem:[%s272 + $0x170] sm:$0xff]
        %v1331 = vld [vmem:[%s272 + $0x178] sm:$0xff]
        %v1332 = vld [vmem:[%s272 + $0x180] sm:$0xff]
        %v1333 = vld [vmem:[%s272 + $0x188] sm:$0xff]
        %v1334 = vld [vmem:[%s272 + $0x190] sm:$0xff]
        %v1335 = vld [vmem:[%s272 + $0x198] sm:$0xff]
        %v1336 = vld [vmem:[%s272 + $0x1a0] sm:$0xff]
        %v1337 = vld [vmem:[%s272 + $0x1a8] sm:$0xff]
        %v1338 = vld [vmem:[%s272 + $0x1b0] sm:$0xff]
        %v1339 = vld [vmem:[%s272 + $0x1b8] sm:$0xff]
        %v1340 = vld [vmem:[%s272 + $0x1c0] sm:$0xff]
        %v1341 = vld [vmem:[%s272 + $0x1c8] sm:$0xff]
        %v1342 = vld [vmem:[%s272 + $0x1d0] sm:$0xff]
        %v1343 = vld [vmem:[%s272 + $0x1d8] sm:$0xff]
        %v1344 = vld [vmem:[%s272 + $0x1e0] sm:$0xff]
        %v1345 = vld [vmem:[%s272 + $0x1e8] sm:$0xff]
        %v1346 = vld [vmem:[%s272 + $0x1f0] sm:$0xff]
        %v1347 = vld [vmem:[%s272 + $0x1f8] sm:$0xff]
        %v1348 = vld [vmem:[%s272 + $0x200] sm:$0xff]
        %v1349 = vld [vmem:[%s272 + $0x208] sm:$0xff]
        %v1350 = vld [vmem:[%s272 + $0x210] sm:$0xff]
        %v1351 = vld [vmem:[%s272 + $0x218] sm:$0xff]
        %v1352 = vld [vmem:[%s272 + $0x220] sm:$0xff]
        %v1353 = vld [vmem:[%s272 + $0x228] sm:$0xff]
        %v1354 = vld [vmem:[%s272 + $0x230] sm:$0xff]
        %v1355 = vld [vmem:[%s272 + $0x238] sm:$0xff]
        %v1356 = vld [vmem:[%s272 + $0x240] sm:$0xff]
        %v1357 = vld [vmem:[%s272 + $0x248] sm:$0xff]
        %v1358 = vld [vmem:[%s272 + $0x250] sm:$0xff]
        %v1359 = vld [vmem:[%s272 + $0x258] sm:$0xff]
        %v1360 = vld [vmem:[%s272 + $0x260] sm:$0xff]
        %v1361 = vld [vmem:[%s272 + $0x268] sm:$0xff]
        %v1362 = vld [vmem:[%s272 + $0x270] sm:$0xff]
        %v1363 = vld [vmem:[%s272 + $0x278] sm:$0xff]
        %v1364 = vld [vmem:[%s272 + $0x280] sm:$0xff]
        %v1365 = vld [vmem:[%s272 + $0x288] sm:$0xff]
        %v1366 = vld [vmem:[%s272 + $0x290] sm:$0xff]
        %v1367 = vld [vmem:[%s272 + $0x298] sm:$0xff]
        %v1368 = vld [vmem:[%s272 + $0x2a0] sm:$0xff]
        %v1369 = vld [vmem:[%s272 + $0x2a8] sm:$0xff]
        %v1370 = vld [vmem:[%s272 + $0x2b0] sm:$0xff]
        %v1371 = vld [vmem:[%s272 + $0x2b8] sm:$0xff]
        %v1372 = vld [vmem:[%s272 + $0x2c0] sm:$0xff]
        %v1373 = vld [vmem:[%s272 + $0x2c8] sm:$0xff]
        %v1374 = vld [vmem:[%s272 + $0x2d0] sm:$0xff]
        %v1375 = vld [vmem:[%s272 + $0x2d8] sm:$0xff]
        %v1376 = vld [vmem:[%s272 + $0x2e0] sm:$0xff]
        %v1377 = vld [vmem:[%s272 + $0x2e8] sm:$0xff]
        %v1378 = vld [vmem:[%s272 + $0x2f0] sm:$0xff]
        %v1379 = vld [vmem:[%s272 + $0x2f8] sm:$0xff]
        %v1380 = vld [vmem:[%s272 + $0x300] sm:$0xff]
        %v1381 = vld [vmem:[%s272 + $0x308] sm:$0xff]
        %v1382 = vld [vmem:[%s272 + $0x310] sm:$0xff]
        %v1383 = vld [vmem:[%s272 + $0x318] sm:$0xff]
        %v1384 = vld [vmem:[%s272 + $0x320] sm:$0xff]
        %v1385 = vld [vmem:[%s272 + $0x328] sm:$0xff]
        %v1386 = vld [vmem:[%s272 + $0x330] sm:$0xff]
        %v1387 = vld [vmem:[%s272 + $0x338] sm:$0xff]
        %v1388 = vld [vmem:[%s272 + $0x340] sm:$0xff]
        %v1389 = vld [vmem:[%s272 + $0x348] sm:$0xff]
        %v1390 = vld [vmem:[%s272 + $0x350] sm:$0xff]
        %v1391 = vld [vmem:[%s272 + $0x358] sm:$0xff]
        %v1392 = vld [vmem:[%s272 + $0x360] sm:$0xff]
        %v1393 = vld [vmem:[%s272 + $0x368] sm:$0xff]
        %v1394 = vld [vmem:[%s272 + $0x370] sm:$0xff]
        %v1395 = vld [vmem:[%s272 + $0x378] sm:$0xff]
        %v1396 = vld [vmem:[%s272 + $0x380] sm:$0xff]
        %v1397 = vld [vmem:[%s272 + $0x388] sm:$0xff]
        %v1398 = vld [vmem:[%s272 + $0x390] sm:$0xff]
        %v1399 = vld [vmem:[%s272 + $0x398] sm:$0xff]
        %v1400 = vld [vmem:[%s272 + $0x3a0] sm:$0xff]
        %v1401 = vld [vmem:[%s272 + $0x3a8] sm:$0xff]
        %v1402 = vld [vmem:[%s272 + $0x3b0] sm:$0xff]
        %v1403 = vld [vmem:[%s272 + $0x3b8] sm:$0xff]
        %v1404 = vld [vmem:[%s272 + $0x3c0] sm:$0xff]
        %v1405 = vld [vmem:[%s272 + $0x3c8] sm:$0xff]
        %v1406 = vld [vmem:[%s272 + $0x3d0] sm:$0xff]
        %v1407 = vld [vmem:[%s272 + $0x3d8] sm:$0xff]
        %v1408 = vld [vmem:[%s272 + $0x3e0] sm:$0xff]
        %v1409 = vld [vmem:[%s272 + $0x3e8] sm:$0xff]
        %v1410 = vld [vmem:[%s272 + $0x3f0] sm:$0xff]
        %v1411 = vld [vmem:[%s272 + $0x3f8] sm:$0xff]
        %v1412 = vld [vmem:[%s308] sm:$0x1]
        %v1414 = vlaneseq
        %v1415 = vshrl.u32 %v1414, 7
        %v1416 = vsub.s32 0, %v1415
        %v1417 = vrot.slane %v1412, %v1416
        %v1547 = vunpack.c.l.b16 %v1284
        %v1548 = vunpack.c.h.b16 %v1284
        %v1549 = vunpack.c.l.b16 %v1285
        %v1550 = vunpack.c.h.b16 %v1285
        %v1551 = vunpack.c.l.b16 %v1286
        %v1552 = vunpack.c.h.b16 %v1286
        %v1553 = vunpack.c.l.b16 %v1287
        %v1554 = vunpack.c.h.b16 %v1287
        %v1555 = vunpack.c.l.b16 %v1288
        %v1556 = vunpack.c.h.b16 %v1288
        %v1557 = vunpack.c.l.b16 %v1289
        %v1558 = vunpack.c.h.b16 %v1289
        %v1559 = vunpack.c.l.b16 %v1290
        %v1560 = vunpack.c.h.b16 %v1290
        %v1561 = vunpack.c.l.b16 %v1291
        %v1562 = vunpack.c.h.b16 %v1291
        %v1563 = vunpack.c.l.b16 %v1292
        %v1564 = vunpack.c.h.b16 %v1292
        %v1565 = vunpack.c.l.b16 %v1293
        %v1566 = vunpack.c.h.b16 %v1293
        %v1567 = vunpack.c.l.b16 %v1294
        %v1568 = vunpack.c.h.b16 %v1294
        %v1569 = vunpack.c.l.b16 %v1295
        %v1570 = vunpack.c.h.b16 %v1295
        %v1571 = vunpack.c.l.b16 %v1296
        %v1572 = vunpack.c.h.b16 %v1296
        %v1573 = vunpack.c.l.b16 %v1297
        %v1574 = vunpack.c.h.b16 %v1297
        %v1575 = vunpack.c.l.b16 %v1298
        %v1576 = vunpack.c.h.b16 %v1298
        %v1577 = vunpack.c.l.b16 %v1299
        %v1578 = vunpack.c.h.b16 %v1299
        %v1579 = vunpack.c.l.b16 %v1300
        %v1580 = vunpack.c.h.b16 %v1300
        %v1581 = vunpack.c.l.b16 %v1301
        %v1582 = vunpack.c.h.b16 %v1301
        %v1583 = vunpack.c.l.b16 %v1302
        %v1584 = vunpack.c.h.b16 %v1302
        %v1585 = vunpack.c.l.b16 %v1303
        %v1586 = vunpack.c.h.b16 %v1303
        %v1587 = vunpack.c.l.b16 %v1304
        %v1588 = vunpack.c.h.b16 %v1304
        %v1589 = vunpack.c.l.b16 %v1305
        %v1590 = vunpack.c.h.b16 %v1305
        %v1591 = vunpack.c.l.b16 %v1306
        %v1592 = vunpack.c.h.b16 %v1306
        %v1593 = vunpack.c.l.b16 %v1307
        %v1594 = vunpack.c.h.b16 %v1307
        %v1595 = vunpack.c.l.b16 %v1308
        %v1596 = vunpack.c.h.b16 %v1308
        %v1597 = vunpack.c.l.b16 %v1309
        %v1598 = vunpack.c.h.b16 %v1309
        %v1599 = vunpack.c.l.b16 %v1310
        %v1600 = vunpack.c.h.b16 %v1310
        %v1601 = vunpack.c.l.b16 %v1311
        %v1602 = vunpack.c.h.b16 %v1311
        %v1603 = vunpack.c.l.b16 %v1312
        %v1604 = vunpack.c.h.b16 %v1312
        %v1605 = vunpack.c.l.b16 %v1313
        %v1606 = vunpack.c.h.b16 %v1313
        %v1607 = vunpack.c.l.b16 %v1314
        %v1608 = vunpack.c.h.b16 %v1314
        %v1609 = vunpack.c.l.b16 %v1315
        %v1610 = vunpack.c.h.b16 %v1315
        %v1611 = vunpack.c.l.b16 %v1316
        %v1612 = vunpack.c.h.b16 %v1316
        %v1613 = vunpack.c.l.b16 %v1317
        %v1614 = vunpack.c.h.b16 %v1317
        %v1615 = vunpack.c.l.b16 %v1318
        %v1616 = vunpack.c.h.b16 %v1318
        %v1617 = vunpack.c.l.b16 %v1319
        %v1618 = vunpack.c.h.b16 %v1319
        %v1619 = vunpack.c.l.b16 %v1320
        %v1620 = vunpack.c.h.b16 %v1320
        %v1621 = vunpack.c.l.b16 %v1321
        %v1622 = vunpack.c.h.b16 %v1321
        %v1623 = vunpack.c.l.b16 %v1322
        %v1624 = vunpack.c.h.b16 %v1322
        %v1625 = vunpack.c.l.b16 %v1323
        %v1626 = vunpack.c.h.b16 %v1323
        %v1627 = vunpack.c.l.b16 %v1324
        %v1628 = vunpack.c.h.b16 %v1324
        %v1629 = vunpack.c.l.b16 %v1325
        %v1630 = vunpack.c.h.b16 %v1325
        %v1631 = vunpack.c.l.b16 %v1326
        %v1632 = vunpack.c.h.b16 %v1326
        %v1633 = vunpack.c.l.b16 %v1327
        %v1634 = vunpack.c.h.b16 %v1327
        %v1635 = vunpack.c.l.b16 %v1328
        %v1636 = vunpack.c.h.b16 %v1328
        %v1637 = vunpack.c.l.b16 %v1329
        %v1638 = vunpack.c.h.b16 %v1329
        %v1639 = vunpack.c.l.b16 %v1330
        %v1640 = vunpack.c.h.b16 %v1330
        %v1641 = vunpack.c.l.b16 %v1331
        %v1642 = vunpack.c.h.b16 %v1331
        %v1643 = vunpack.c.l.b16 %v1332
        %v1644 = vunpack.c.h.b16 %v1332
        %v1645 = vunpack.c.l.b16 %v1333
        %v1646 = vunpack.c.h.b16 %v1333
        %v1647 = vunpack.c.l.b16 %v1334
        %v1648 = vunpack.c.h.b16 %v1334
        %v1649 = vunpack.c.l.b16 %v1335
        %v1650 = vunpack.c.h.b16 %v1335
        %v1651 = vunpack.c.l.b16 %v1336
        %v1652 = vunpack.c.h.b16 %v1336
        %v1653 = vunpack.c.l.b16 %v1337
        %v1654 = vunpack.c.h.b16 %v1337
        %v1655 = vunpack.c.l.b16 %v1338
        %v1656 = vunpack.c.h.b16 %v1338
        %v1657 = vunpack.c.l.b16 %v1339
        %v1658 = vunpack.c.h.b16 %v1339
        %v1659 = vunpack.c.l.b16 %v1340
        %v1660 = vunpack.c.h.b16 %v1340
        %v1661 = vunpack.c.l.b16 %v1341
        %v1662 = vunpack.c.h.b16 %v1341
        %v1663 = vunpack.c.l.b16 %v1342
        %v1664 = vunpack.c.h.b16 %v1342
        %v1665 = vunpack.c.l.b16 %v1343
        %v1666 = vunpack.c.h.b16 %v1343
        %v1667 = vunpack.c.l.b16 %v1344
        %v1668 = vunpack.c.h.b16 %v1344
        %v1669 = vunpack.c.l.b16 %v1345
        %v1670 = vunpack.c.h.b16 %v1345
        %v1671 = vunpack.c.l.b16 %v1346
        %v1672 = vunpack.c.h.b16 %v1346
        %v1673 = vunpack.c.l.b16 %v1347
        %v1674 = vunpack.c.h.b16 %v1347
        %v1675 = vunpack.c.l.b16 %v1348
        %v1676 = vunpack.c.h.b16 %v1348
        %v1677 = vunpack.c.l.b16 %v1349
        %v1678 = vunpack.c.h.b16 %v1349
        %v1679 = vunpack.c.l.b16 %v1350
        %v1680 = vunpack.c.h.b16 %v1350
        %v1681 = vunpack.c.l.b16 %v1351
        %v1682 = vunpack.c.h.b16 %v1351
        %v1683 = vunpack.c.l.b16 %v1352
        %v1684 = vunpack.c.h.b16 %v1352
        %v1685 = vunpack.c.l.b16 %v1353
        %v1686 = vunpack.c.h.b16 %v1353
        %v1687 = vunpack.c.l.b16 %v1354
        %v1688 = vunpack.c.h.b16 %v1354
        %v1689 = vunpack.c.l.b16 %v1355
        %v1690 = vunpack.c.h.b16 %v1355
        %v1691 = vunpack.c.l.b16 %v1356
        %v1692 = vunpack.c.h.b16 %v1356
        %v1693 = vunpack.c.l.b16 %v1357
        %v1694 = vunpack.c.h.b16 %v1357
        %v1695 = vunpack.c.l.b16 %v1358
        %v1696 = vunpack.c.h.b16 %v1358
        %v1697 = vunpack.c.l.b16 %v1359
        %v1698 = vunpack.c.h.b16 %v1359
        %v1699 = vunpack.c.l.b16 %v1360
        %v1700 = vunpack.c.h.b16 %v1360
        %v1701 = vunpack.c.l.b16 %v1361
        %v1702 = vunpack.c.h.b16 %v1361
        %v1703 = vunpack.c.l.b16 %v1362
        %v1704 = vunpack.c.h.b16 %v1362
        %v1705 = vunpack.c.l.b16 %v1363
        %v1706 = vunpack.c.h.b16 %v1363
        %v1707 = vunpack.c.l.b16 %v1364
        %v1708 = vunpack.c.h.b16 %v1364
        %v1709 = vunpack.c.l.b16 %v1365
        %v1710 = vunpack.c.h.b16 %v1365
        %v1711 = vunpack.c.l.b16 %v1366
        %v1712 = vunpack.c.h.b16 %v1366
        %v1713 = vunpack.c.l.b16 %v1367
        %v1714 = vunpack.c.h.b16 %v1367
        %v1715 = vunpack.c.l.b16 %v1368
        %v1716 = vunpack.c.h.b16 %v1368
        %v1717 = vunpack.c.l.b16 %v1369
        %v1718 = vunpack.c.h.b16 %v1369
        %v1719 = vunpack.c.l.b16 %v1370
        %v1720 = vunpack.c.h.b16 %v1370
        %v1721 = vunpack.c.l.b16 %v1371
        %v1722 = vunpack.c.h.b16 %v1371
        %v1723 = vunpack.c.l.b16 %v1372
        %v1724 = vunpack.c.h.b16 %v1372
        %v1725 = vunpack.c.l.b16 %v1373
        %v1726 = vunpack.c.h.b16 %v1373
        %v1727 = vunpack.c.l.b16 %v1374
        %v1728 = vunpack.c.h.b16 %v1374
        %v1729 = vunpack.c.l.b16 %v1375
        %v1730 = vunpack.c.h.b16 %v1375
        %v1731 = vunpack.c.l.b16 %v1376
        %v1732 = vunpack.c.h.b16 %v1376
        %v1733 = vunpack.c.l.b16 %v1377
        %v1734 = vunpack.c.h.b16 %v1377
        %v1735 = vunpack.c.l.b16 %v1378
        %v1736 = vunpack.c.h.b16 %v1378
        %v1737 = vunpack.c.l.b16 %v1379
        %v1738 = vunpack.c.h.b16 %v1379
        %v1739 = vunpack.c.l.b16 %v1380
        %v1740 = vunpack.c.h.b16 %v1380
        %v1741 = vunpack.c.l.b16 %v1381
        %v1742 = vunpack.c.h.b16 %v1381
        %v1743 = vunpack.c.l.b16 %v1382
        %v1744 = vunpack.c.h.b16 %v1382
        %v1745 = vunpack.c.l.b16 %v1383
        %v1746 = vunpack.c.h.b16 %v1383
        %v1747 = vunpack.c.l.b16 %v1384
        %v1748 = vunpack.c.h.b16 %v1384
        %v1749 = vunpack.c.l.b16 %v1385
        %v1750 = vunpack.c.h.b16 %v1385
        %v1751 = vunpack.c.l.b16 %v1386
        %v1752 = vunpack.c.h.b16 %v1386
        %v1753 = vunpack.c.l.b16 %v1387
        %v1754 = vunpack.c.h.b16 %v1387
        %v1755 = vunpack.c.l.b16 %v1388
        %v1756 = vunpack.c.h.b16 %v1388
        %v1757 = vunpack.c.l.b16 %v1389
        %v1758 = vunpack.c.h.b16 %v1389
        %v1759 = vunpack.c.l.b16 %v1390
        %v1760 = vunpack.c.h.b16 %v1390
        %v1761 = vunpack.c.l.b16 %v1391
        %v1762 = vunpack.c.h.b16 %v1391
        %v1763 = vunpack.c.l.b16 %v1392
        %v1764 = vunpack.c.h.b16 %v1392
        %v1765 = vunpack.c.l.b16 %v1393
        %v1766 = vunpack.c.h.b16 %v1393
        %v1767 = vunpack.c.l.b16 %v1394
        %v1768 = vunpack.c.h.b16 %v1394
        %v1769 = vunpack.c.l.b16 %v1395
        %v1770 = vunpack.c.h.b16 %v1395
        %v1771 = vunpack.c.l.b16 %v1396
        %v1772 = vunpack.c.h.b16 %v1396
        %v1773 = vunpack.c.l.b16 %v1397
        %v1774 = vunpack.c.h.b16 %v1397
        %v1775 = vunpack.c.l.b16 %v1398
        %v1776 = vunpack.c.h.b16 %v1398
        %v1777 = vunpack.c.l.b16 %v1399
        %v1778 = vunpack.c.h.b16 %v1399
        %v1779 = vunpack.c.l.b16 %v1400
        %v1780 = vunpack.c.h.b16 %v1400
        %v1781 = vunpack.c.l.b16 %v1401
        %v1782 = vunpack.c.h.b16 %v1401
        %v1783 = vunpack.c.l.b16 %v1402
        %v1784 = vunpack.c.h.b16 %v1402
        %v1785 = vunpack.c.l.b16 %v1403
        %v1786 = vunpack.c.h.b16 %v1403
        %v1787 = vunpack.c.l.b16 %v1404
        %v1788 = vunpack.c.h.b16 %v1404
        %v1789 = vunpack.c.l.b16 %v1405
        %v1790 = vunpack.c.h.b16 %v1405
        %v1791 = vunpack.c.l.b16 %v1406
        %v1792 = vunpack.c.h.b16 %v1406
        %v1793 = vunpack.c.l.b16 %v1407
        %v1794 = vunpack.c.h.b16 %v1407
        %v1795 = vunpack.c.l.b16 %v1408
        %v1796 = vunpack.c.h.b16 %v1408
        %v1797 = vunpack.c.l.b16 %v1409
        %v1798 = vunpack.c.h.b16 %v1409
        %v1799 = vunpack.c.l.b16 %v1410
        %v1800 = vunpack.c.h.b16 %v1410
        %v1801 = vunpack.c.l.b16 %v1411
        %v1802 = vunpack.c.h.b16 %v1411
        %v1803 = vpack.c.b16 %v1579, %v1547
        %v1804 = vpack.c.b16 %v1580, %v1548
        %v1805 = vpack.c.b16 %v1581, %v1549
        %v1806 = vpack.c.b16 %v1582, %v1550
        %v1807 = vpack.c.b16 %v1583, %v1551
        %v1808 = vpack.c.b16 %v1584, %v1552
        %v1809 = vpack.c.b16 %v1585, %v1553
        %v1810 = vpack.c.b16 %v1586, %v1554
        %v1811 = vpack.c.b16 %v1587, %v1555
        %v1812 = vpack.c.b16 %v1588, %v1556
        %v1813 = vpack.c.b16 %v1589, %v1557
        %v1814 = vpack.c.b16 %v1590, %v1558
        %v1815 = vpack.c.b16 %v1591, %v1559
        %v1816 = vpack.c.b16 %v1592, %v1560
        %v1817 = vpack.c.b16 %v1593, %v1561
        %v1818 = vpack.c.b16 %v1594, %v1562
        %v1819 = vpack.c.b16 %v1595, %v1563
        %v1820 = vpack.c.b16 %v1596, %v1564
        %v1821 = vpack.c.b16 %v1597, %v1565
        %v1822 = vpack.c.b16 %v1598, %v1566
        %v1823 = vpack.c.b16 %v1599, %v1567
        %v1824 = vpack.c.b16 %v1600, %v1568
        %v1825 = vpack.c.b16 %v1601, %v1569
        %v1826 = vpack.c.b16 %v1602, %v1570
        %v1827 = vpack.c.b16 %v1603, %v1571
        %v1828 = vpack.c.b16 %v1604, %v1572
        %v1829 = vpack.c.b16 %v1605, %v1573
        %v1830 = vpack.c.b16 %v1606, %v1574
        %v1831 = vpack.c.b16 %v1607, %v1575
        %v1832 = vpack.c.b16 %v1608, %v1576
        %v1833 = vpack.c.b16 %v1609, %v1577
        %v1834 = vpack.c.b16 %v1610, %v1578
        %v1835 = vpack.c.b16 %v1643, %v1611
        %v1836 = vpack.c.b16 %v1644, %v1612
        %v1837 = vpack.c.b16 %v1645, %v1613
        %v1838 = vpack.c.b16 %v1646, %v1614
        %v1839 = vpack.c.b16 %v1647, %v1615
        %v1840 = vpack.c.b16 %v1648, %v1616
        %v1841 = vpack.c.b16 %v1649, %v1617
        %v1842 = vpack.c.b16 %v1650, %v1618
        %v1843 = vpack.c.b16 %v1651, %v1619
        %v1844 = vpack.c.b16 %v1652, %v1620
        %v1845 = vpack.c.b16 %v1653, %v1621
        %v1846 = vpack.c.b16 %v1654, %v1622
        %v1847 = vpack.c.b16 %v1655, %v1623
        %v1848 = vpack.c.b16 %v1656, %v1624
        %v1849 = vpack.c.b16 %v1657, %v1625
        %v1850 = vpack.c.b16 %v1658, %v1626
        %v1851 = vpack.c.b16 %v1659, %v1627
        %v1852 = vpack.c.b16 %v1660, %v1628
        %v1853 = vpack.c.b16 %v1661, %v1629
        %v1854 = vpack.c.b16 %v1662, %v1630
        %v1855 = vpack.c.b16 %v1663, %v1631
        %v1856 = vpack.c.b16 %v1664, %v1632
        %v1857 = vpack.c.b16 %v1665, %v1633
        %v1858 = vpack.c.b16 %v1666, %v1634
        %v1859 = vpack.c.b16 %v1667, %v1635
        %v1860 = vpack.c.b16 %v1668, %v1636
        %v1861 = vpack.c.b16 %v1669, %v1637
        %v1862 = vpack.c.b16 %v1670, %v1638
        %v1863 = vpack.c.b16 %v1671, %v1639
        %v1864 = vpack.c.b16 %v1672, %v1640
        %v1865 = vpack.c.b16 %v1673, %v1641
        %v1866 = vpack.c.b16 %v1674, %v1642
        %v1867 = vpack.c.b16 %v1707, %v1675
        %v1868 = vpack.c.b16 %v1708, %v1676
        %v1869 = vpack.c.b16 %v1709, %v1677
        %v1870 = vpack.c.b16 %v1710, %v1678
        %v1871 = vpack.c.b16 %v1711, %v1679
        %v1872 = vpack.c.b16 %v1712, %v1680
        %v1873 = vpack.c.b16 %v1713, %v1681
        %v1874 = vpack.c.b16 %v1714, %v1682
        %v1875 = vpack.c.b16 %v1715, %v1683
        %v1876 = vpack.c.b16 %v1716, %v1684
        %v1877 = vpack.c.b16 %v1717, %v1685
        %v1878 = vpack.c.b16 %v1718, %v1686
        %v1879 = vpack.c.b16 %v1719, %v1687
        %v1880 = vpack.c.b16 %v1720, %v1688
        %v1881 = vpack.c.b16 %v1721, %v1689
        %v1882 = vpack.c.b16 %v1722, %v1690
        %v1883 = vpack.c.b16 %v1723, %v1691
        %v1884 = vpack.c.b16 %v1724, %v1692
        %v1885 = vpack.c.b16 %v1725, %v1693
        %v1886 = vpack.c.b16 %v1726, %v1694
        %v1887 = vpack.c.b16 %v1727, %v1695
        %v1888 = vpack.c.b16 %v1728, %v1696
        %v1889 = vpack.c.b16 %v1729, %v1697
        %v1890 = vpack.c.b16 %v1730, %v1698
        %v1891 = vpack.c.b16 %v1731, %v1699
        %v1892 = vpack.c.b16 %v1732, %v1700
        %v1893 = vpack.c.b16 %v1733, %v1701
        %v1894 = vpack.c.b16 %v1734, %v1702
        %v1895 = vpack.c.b16 %v1735, %v1703
        %v1896 = vpack.c.b16 %v1736, %v1704
        %v1897 = vpack.c.b16 %v1737, %v1705
        %v1898 = vpack.c.b16 %v1738, %v1706
        %v1899 = vpack.c.b16 %v1771, %v1739
        %v1900 = vpack.c.b16 %v1772, %v1740
        %v1901 = vpack.c.b16 %v1773, %v1741
        %v1902 = vpack.c.b16 %v1774, %v1742
        %v1903 = vpack.c.b16 %v1775, %v1743
        %v1904 = vpack.c.b16 %v1776, %v1744
        %v1905 = vpack.c.b16 %v1777, %v1745
        %v1906 = vpack.c.b16 %v1778, %v1746
        %v1907 = vpack.c.b16 %v1779, %v1747
        %v1908 = vpack.c.b16 %v1780, %v1748
        %v1909 = vpack.c.b16 %v1781, %v1749
        %v1910 = vpack.c.b16 %v1782, %v1750
        %v1911 = vpack.c.b16 %v1783, %v1751
        %v1912 = vpack.c.b16 %v1784, %v1752
        %v1913 = vpack.c.b16 %v1785, %v1753
        %v1914 = vpack.c.b16 %v1786, %v1754
        %v1915 = vpack.c.b16 %v1787, %v1755
        %v1916 = vpack.c.b16 %v1788, %v1756
        %v1917 = vpack.c.b16 %v1789, %v1757
        %v1918 = vpack.c.b16 %v1790, %v1758
        %v1919 = vpack.c.b16 %v1791, %v1759
        %v1920 = vpack.c.b16 %v1792, %v1760
        %v1921 = vpack.c.b16 %v1793, %v1761
        %v1922 = vpack.c.b16 %v1794, %v1762
        %v1923 = vpack.c.b16 %v1795, %v1763
        %v1924 = vpack.c.b16 %v1796, %v1764
        %v1925 = vpack.c.b16 %v1797, %v1765
        %v1926 = vpack.c.b16 %v1798, %v1766
        %v1927 = vpack.c.b16 %v1799, %v1767
        %v1928 = vpack.c.b16 %v1800, %v1768
        %v1929 = vpack.c.b16 %v1801, %v1769
        %v1930 = vpack.c.b16 %v1802, %v1770
        %2059 = vmatprep.subr.bf16.mxu0 0
        %2060 = vmatpush1.bf16.xpose.msra.mxu0 0
        %2061 = vmatprep.subr.bf16.mxu0 0
        %2062 = vmatpush1.bf16.xpose.msra.mxu0 0
        %2063 = vmatprep.subr.bf16.mxu0 0
        %2064 = vmatpush1.bf16.xpose.msra.mxu0 0
        %2065 = vmatprep.subr.bf16.mxu0 0
        %2066 = vmatpush1.bf16.xpose.msra.mxu0 0
        %2067 = vmatprep.subr.bf16.mxu0 %v1900
        %2068 = vmatpush1.bf16.xpose.msra.mxu0 %v1899
        %2069 = vmatprep.subr.bf16.mxu0 %v1868
        %2070 = vmatpush1.bf16.xpose.msra.mxu0 %v1867
        %2071 = vmatprep.subr.bf16.mxu0 %v1836
        %2072 = vmatpush1.bf16.xpose.msra.mxu0 %v1835
        %2073 = vmatprep.subr.bf16.mxu0 %v1804
        %2074 = vmatpush1.bf16.xpose.msra.mxu0 %v1803
        %2075 = vmatprep.subr.bf16.mxu0 0
        %2076 = vmatpush2.bf16.xpose.msra.mxu0 0
        %2077 = vmatprep.subr.bf16.mxu0 0
        %2078 = vmatpush2.bf16.xpose.msra.mxu0 0
        %2079 = vmatprep.subr.bf16.mxu0 0
        %2080 = vmatpush2.bf16.xpose.msra.mxu0 0
        %2081 = vmatprep.subr.bf16.mxu0 0
        %2082 = vmatpush2.bf16.xpose.msra.mxu0 0
        %2083 = vmatprep.subr.bf16.mxu0 0
        %2084 = vmatpush2.bf16.xpose.msra.mxu0 0
        %2085 = vmatprep.subr.bf16.mxu0 0
        %2086 = vmatpush2.bf16.xpose.msra.mxu0 0
        %2087 = vmatprep.subr.bf16.mxu0 0
        %2088 = vmatpush2.bf16.xpose.msra.mxu0 0
        %2089 = vmatprep.subr.bf16.mxu0 0
        %2090 = vmatpush2.bf16.xpose.msra.mxu0 0
        %2091 = vmatprep.mubr.bf16.mxu0 %v1253
        %2092 = vmatmul.mubr.bf16.gmra.mxu0 %v1252
        %v2093 = vpop.f32.mrf.mxu0
        %v2094 = vadd.f32 %v1417, %v2093
        %v2095 = vpop.f32.mrf.mxu0
        %v2096 = vpop.f32.mrf.mxu0
        %v2097 = vpop.f32.mrf.mxu0
        %2098 = vdwg.mxu0
        %2099 = vmatprep.subr.bf16.mxu0 0
        %2100 = vmatpush1.bf16.xpose.msra.mxu0 0
        %2101 = vmatprep.subr.bf16.mxu0 0
        %2102 = vmatpush1.bf16.xpose.msra.mxu0 0
        %2103 = vmatprep.subr.bf16.mxu0 0
        %2104 = vmatpush1.bf16.xpose.msra.mxu0 0
        %2105 = vmatprep.subr.bf16.mxu0 0
        %2106 = vmatpush1.bf16.xpose.msra.mxu0 0
        %2107 = vmatprep.subr.bf16.mxu0 %v1902
        %2108 = vmatpush1.bf16.xpose.msra.mxu0 %v1901
        %2109 = vmatprep.subr.bf16.mxu0 %v1870
        %2110 = vmatpush1.bf16.xpose.msra.mxu0 %v1869
        %2111 = vmatprep.subr.bf16.mxu0 %v1838
        %2112 = vmatpush1.bf16.xpose.msra.mxu0 %v1837
        %2113 = vmatprep.subr.bf16.mxu0 %v1806
        %2114 = vmatpush1.bf16.xpose.msra.mxu0 %v1805
        %2115 = vmatprep.subr.bf16.mxu0 0
        %2116 = vmatpush2.bf16.xpose.msra.mxu0 0
        %2117 = vmatprep.subr.bf16.mxu0 0
        %2118 = vmatpush2.bf16.xpose.msra.mxu0 0
        %2119 = vmatprep.subr.bf16.mxu0 0
        %2120 = vmatpush2.bf16.xpose.msra.mxu0 0
        %2121 = vmatprep.subr.bf16.mxu0 0
        %2122 = vmatpush2.bf16.xpose.msra.mxu0 0
        %2123 = vmatprep.subr.bf16.mxu0 0
        %2124 = vmatpush2.bf16.xpose.msra.mxu0 0
        %2125 = vmatprep.subr.bf16.mxu0 0
        %2126 = vmatpush2.bf16.xpose.msra.mxu0 0
        %2127 = vmatprep.subr.bf16.mxu0 0
        %2128 = vmatpush2.bf16.xpose.msra.mxu0 0
        %2129 = vmatprep.subr.bf16.mxu0 0
        %2130 = vmatpush2.bf16.xpose.msra.mxu0 0
        %2131 = vmatprep.mubr.bf16.mxu0 %v1255
        %2132 = vmatmul.mubr.bf16.gmra.mxu0 %v1254
        %v2133 = vpop.f32.mrf.mxu0
        %v2134 = vadd.f32 %v2094, %v2133
        %v2135 = vpop.f32.mrf.mxu0
        %v2136 = vpop.f32.mrf.mxu0
        %v2137 = vpop.f32.mrf.mxu0
        %2138 = vdwg.mxu0
        %2139 = vmatprep.subr.bf16.mxu0 0
        %2140 = vmatpush1.bf16.xpose.msra.mxu0 0
        %2141 = vmatprep.subr.bf16.mxu0 0
        %2142 = vmatpush1.bf16.xpose.msra.mxu0 0
        %2143 = vmatprep.subr.bf16.mxu0 0
        %2144 = vmatpush1.bf16.xpose.msra.mxu0 0
        %2145 = vmatprep.subr.bf16.mxu0 0
        %2146 = vmatpush1.bf16.xpose.msra.mxu0 0
        %2147 = vmatprep.subr.bf16.mxu0 %v1904
        %2148 = vmatpush1.bf16.xpose.msra.mxu0 %v1903
        %2149 = vmatprep.subr.bf16.mxu0 %v1872
        %2150 = vmatpush1.bf16.xpose.msra.mxu0 %v1871
        %2151 = vmatprep.subr.bf16.mxu0 %v1840
        %2152 = vmatpush1.bf16.xpose.msra.mxu0 %v1839
        %2153 = vmatprep.subr.bf16.mxu0 %v1808
        %2154 = vmatpush1.bf16.xpose.msra.mxu0 %v1807
        %2155 = vmatprep.subr.bf16.mxu0 0
        %2156 = vmatpush2.bf16.xpose.msra.mxu0 0
        %2157 = vmatprep.subr.bf16.mxu0 0
        %2158 = vmatpush2.bf16.xpose.msra.mxu0 0
        %2159 = vmatprep.subr.bf16.mxu0 0
        %2160 = vmatpush2.bf16.xpose.msra.mxu0 0
        %2161 = vmatprep.subr.bf16.mxu0 0
        %2162 = vmatpush2.bf16.xpose.msra.mxu0 0
        %2163 = vmatprep.subr.bf16.mxu0 0
        %2164 = vmatpush2.bf16.xpose.msra.mxu0 0
        %2165 = vmatprep.subr.bf16.mxu0 0
        %2166 = vmatpush2.bf16.xpose.msra.mxu0 0
        %2167 = vmatprep.subr.bf16.mxu0 0
        %2168 = vmatpush2.bf16.xpose.msra.mxu0 0
        %2169 = vmatprep.subr.bf16.mxu0 0
        %2170 = vmatpush2.bf16.xpose.msra.mxu0 0
        %2171 = vmatprep.mubr.bf16.mxu0 %v1257
        %2172 = vmatmul.mubr.bf16.gmra.mxu0 %v1256
        %v2173 = vpop.f32.mrf.mxu0
        %v2174 = vadd.f32 %v2134, %v2173
        %v2175 = vpop.f32.mrf.mxu0
        %v2176 = vpop.f32.mrf.mxu0
        %v2177 = vpop.f32.mrf.mxu0
        %2178 = vdwg.mxu0
        %2179 = vmatprep.subr.bf16.mxu0 0
        %2180 = vmatpush1.bf16.xpose.msra.mxu0 0
        %2181 = vmatprep.subr.bf16.mxu0 0
        %2182 = vmatpush1.bf16.xpose.msra.mxu0 0
        %2183 = vmatprep.subr.bf16.mxu0 0
        %2184 = vmatpush1.bf16.xpose.msra.mxu0 0
        %2185 = vmatprep.subr.bf16.mxu0 0
        %2186 = vmatpush1.bf16.xpose.msra.mxu0 0
        %2187 = vmatprep.subr.bf16.mxu0 %v1906
        %2188 = vmatpush1.bf16.xpose.msra.mxu0 %v1905
        %2189 = vmatprep.subr.bf16.mxu0 %v1874
        %2190 = vmatpush1.bf16.xpose.msra.mxu0 %v1873
        %2191 = vmatprep.subr.bf16.mxu0 %v1842
        %2192 = vmatpush1.bf16.xpose.msra.mxu0 %v1841
        %2193 = vmatprep.subr.bf16.mxu0 %v1810
        %2194 = vmatpush1.bf16.xpose.msra.mxu0 %v1809
        %2195 = vmatprep.subr.bf16.mxu0 0
        %2196 = vmatpush2.bf16.xpose.msra.mxu0 0
        %2197 = vmatprep.subr.bf16.mxu0 0
        %2198 = vmatpush2.bf16.xpose.msra.mxu0 0
        %2199 = vmatprep.subr.bf16.mxu0 0
        %2200 = vmatpush2.bf16.xpose.msra.mxu0 0
        %2201 = vmatprep.subr.bf16.mxu0 0
        %2202 = vmatpush2.bf16.xpose.msra.mxu0 0
        %2203 = vmatprep.subr.bf16.mxu0 0
        %2204 = vmatpush2.bf16.xpose.msra.mxu0 0
        %2205 = vmatprep.subr.bf16.mxu0 0
        %2206 = vmatpush2.bf16.xpose.msra.mxu0 0
        %2207 = vmatprep.subr.bf16.mxu0 0
        %2208 = vmatpush2.bf16.xpose.msra.mxu0 0
        %2209 = vmatprep.subr.bf16.mxu0 0
        %2210 = vmatpush2.bf16.xpose.msra.mxu0 0
        %2211 = vmatprep.mubr.bf16.mxu0 %v1259
        %2212 = vmatmul.mubr.bf16.gmra.mxu0 %v1258
        %v2213 = vpop.f32.mrf.mxu0
        %v2214 = vadd.f32 %v2174, %v2213
        %v2215 = vpop.f32.mrf.mxu0
        %v2216 = vpop.f32.mrf.mxu0
        %v2217 = vpop.f32.mrf.mxu0
        %2218 = vdwg.mxu0
        %2219 = vmatprep.subr.bf16.mxu0 0
        %2220 = vmatpush1.bf16.xpose.msra.mxu0 0
        %2221 = vmatprep.subr.bf16.mxu0 0
        %2222 = vmatpush1.bf16.xpose.msra.mxu0 0
        %2223 = vmatprep.subr.bf16.mxu0 0
        %2224 = vmatpush1.bf16.xpose.msra.mxu0 0
        %2225 = vmatprep.subr.bf16.mxu0 0
        %2226 = vmatpush1.bf16.xpose.msra.mxu0 0
        %2227 = vmatprep.subr.bf16.mxu0 %v1908
        %2228 = vmatpush1.bf16.xpose.msra.mxu0 %v1907
        %2229 = vmatprep.subr.bf16.mxu0 %v1876
        %2230 = vmatpush1.bf16.xpose.msra.mxu0 %v1875
        %2231 = vmatprep.subr.bf16.mxu0 %v1844
        %2232 = vmatpush1.bf16.xpose.msra.mxu0 %v1843
        %2233 = vmatprep.subr.bf16.mxu0 %v1812
        %2234 = vmatpush1.bf16.xpose.msra.mxu0 %v1811
        %2235 = vmatprep.subr.bf16.mxu0 0
        %2236 = vmatpush2.bf16.xpose.msra.mxu0 0
        %2237 = vmatprep.subr.bf16.mxu0 0
        %2238 = vmatpush2.bf16.xpose.msra.mxu0 0
        %2239 = vmatprep.subr.bf16.mxu0 0
        %2240 = vmatpush2.bf16.xpose.msra.mxu0 0
        %2241 = vmatprep.subr.bf16.mxu0 0
        %2242 = vmatpush2.bf16.xpose.msra.mxu0 0
        %2243 = vmatprep.subr.bf16.mxu0 0
        %2244 = vmatpush2.bf16.xpose.msra.mxu0 0
        %2245 = vmatprep.subr.bf16.mxu0 0
        %2246 = vmatpush2.bf16.xpose.msra.mxu0 0
        %2247 = vmatprep.subr.bf16.mxu0 0
        %2248 = vmatpush2.bf16.xpose.msra.mxu0 0
        %2249 = vmatprep.subr.bf16.mxu0 0
        %2250 = vmatpush2.bf16.xpose.msra.mxu0 0
        %2251 = vmatprep.mubr.bf16.mxu0 %v1261
        %2252 = vmatmul.mubr.bf16.gmra.mxu0 %v1260
        %v2253 = vpop.f32.mrf.mxu0
        %v2254 = vadd.f32 %v2214, %v2253
        %v2255 = vpop.f32.mrf.mxu0
        %v2256 = vpop.f32.mrf.mxu0
        %v2257 = vpop.f32.mrf.mxu0
        %2258 = vdwg.mxu0
        %2259 = vmatprep.subr.bf16.mxu0 0
        %2260 = vmatpush1.bf16.xpose.msra.mxu0 0
        %2261 = vmatprep.subr.bf16.mxu0 0
        %2262 = vmatpush1.bf16.xpose.msra.mxu0 0
        %2263 = vmatprep.subr.bf16.mxu0 0
        %2264 = vmatpush1.bf16.xpose.msra.mxu0 0
        %2265 = vmatprep.subr.bf16.mxu0 0
        %2266 = vmatpush1.bf16.xpose.msra.mxu0 0
        %2267 = vmatprep.subr.bf16.mxu0 %v1910
        %2268 = vmatpush1.bf16.xpose.msra.mxu0 %v1909
        %2269 = vmatprep.subr.bf16.mxu0 %v1878
        %2270 = vmatpush1.bf16.xpose.msra.mxu0 %v1877
        %2271 = vmatprep.subr.bf16.mxu0 %v1846
        %2272 = vmatpush1.bf16.xpose.msra.mxu0 %v1845
        %2273 = vmatprep.subr.bf16.mxu0 %v1814
        %2274 = vmatpush1.bf16.xpose.msra.mxu0 %v1813
        %2275 = vmatprep.subr.bf16.mxu0 0
        %2276 = vmatpush2.bf16.xpose.msra.mxu0 0
        %2277 = vmatprep.subr.bf16.mxu0 0
        %2278 = vmatpush2.bf16.xpose.msra.mxu0 0
        %2279 = vmatprep.subr.bf16.mxu0 0
        %2280 = vmatpush2.bf16.xpose.msra.mxu0 0
        %2281 = vmatprep.subr.bf16.mxu0 0
        %2282 = vmatpush2.bf16.xpose.msra.mxu0 0
        %2283 = vmatprep.subr.bf16.mxu0 0
        %2284 = vmatpush2.bf16.xpose.msra.mxu0 0
        %2285 = vmatprep.subr.bf16.mxu0 0
        %2286 = vmatpush2.bf16.xpose.msra.mxu0 0
        %2287 = vmatprep.subr.bf16.mxu0 0
        %2288 = vmatpush2.bf16.xpose.msra.mxu0 0
        %2289 = vmatprep.subr.bf16.mxu0 0
        %2290 = vmatpush2.bf16.xpose.msra.mxu0 0
        %2291 = vmatprep.mubr.bf16.mxu0 %v1263
        %2292 = vmatmul.mubr.bf16.gmra.mxu0 %v1262
        %v2293 = vpop.f32.mrf.mxu0
        %v2294 = vadd.f32 %v2254, %v2293
        %v2295 = vpop.f32.mrf.mxu0
        %v2296 = vpop.f32.mrf.mxu0
        %v2297 = vpop.f32.mrf.mxu0
        %2298 = vdwg.mxu0
        %2299 = vmatprep.subr.bf16.mxu0 0
        %2300 = vmatpush1.bf16.xpose.msra.mxu0 0
        %2301 = vmatprep.subr.bf16.mxu0 0
        %2302 = vmatpush1.bf16.xpose.msra.mxu0 0
        %2303 = vmatprep.subr.bf16.mxu0 0
        %2304 = vmatpush1.bf16.xpose.msra.mxu0 0
        %2305 = vmatprep.subr.bf16.mxu0 0
        %2306 = vmatpush1.bf16.xpose.msra.mxu0 0
        %2307 = vmatprep.subr.bf16.mxu0 %v1912
        %2308 = vmatpush1.bf16.xpose.msra.mxu0 %v1911
        %2309 = vmatprep.subr.bf16.mxu0 %v1880
        %2310 = vmatpush1.bf16.xpose.msra.mxu0 %v1879
        %2311 = vmatprep.subr.bf16.mxu0 %v1848
        %2312 = vmatpush1.bf16.xpose.msra.mxu0 %v1847
        %2313 = vmatprep.subr.bf16.mxu0 %v1816
        %2314 = vmatpush1.bf16.xpose.msra.mxu0 %v1815
        %2315 = vmatprep.subr.bf16.mxu0 0
        %2316 = vmatpush2.bf16.xpose.msra.mxu0 0
        %2317 = vmatprep.subr.bf16.mxu0 0
        %2318 = vmatpush2.bf16.xpose.msra.mxu0 0
        %2319 = vmatprep.subr.bf16.mxu0 0
        %2320 = vmatpush2.bf16.xpose.msra.mxu0 0
        %2321 = vmatprep.subr.bf16.mxu0 0
        %2322 = vmatpush2.bf16.xpose.msra.mxu0 0
        %2323 = vmatprep.subr.bf16.mxu0 0
        %2324 = vmatpush2.bf16.xpose.msra.mxu0 0
        %2325 = vmatprep.subr.bf16.mxu0 0
        %2326 = vmatpush2.bf16.xpose.msra.mxu0 0
        %2327 = vmatprep.subr.bf16.mxu0 0
        %2328 = vmatpush2.bf16.xpose.msra.mxu0 0
        %2329 = vmatprep.subr.bf16.mxu0 0
        %2330 = vmatpush2.bf16.xpose.msra.mxu0 0
        %2331 = vmatprep.mubr.bf16.mxu0 %v1265
        %2332 = vmatmul.mubr.bf16.gmra.mxu0 %v1264
        %v2333 = vpop.f32.mrf.mxu0
        %v2334 = vadd.f32 %v2294, %v2333
        %v2335 = vpop.f32.mrf.mxu0
        %v2336 = vpop.f32.mrf.mxu0
        %v2337 = vpop.f32.mrf.mxu0
        %2338 = vdwg.mxu0
        %2339 = vmatprep.subr.bf16.mxu0 0
        %2340 = vmatpush1.bf16.xpose.msra.mxu0 0
        %2341 = vmatprep.subr.bf16.mxu0 0
        %2342 = vmatpush1.bf16.xpose.msra.mxu0 0
        %2343 = vmatprep.subr.bf16.mxu0 0
        %2344 = vmatpush1.bf16.xpose.msra.mxu0 0
        %2345 = vmatprep.subr.bf16.mxu0 0
        %2346 = vmatpush1.bf16.xpose.msra.mxu0 0
        %2347 = vmatprep.subr.bf16.mxu0 %v1914
        %2348 = vmatpush1.bf16.xpose.msra.mxu0 %v1913
        %2349 = vmatprep.subr.bf16.mxu0 %v1882
        %2350 = vmatpush1.bf16.xpose.msra.mxu0 %v1881
        %2351 = vmatprep.subr.bf16.mxu0 %v1850
        %2352 = vmatpush1.bf16.xpose.msra.mxu0 %v1849
        %2353 = vmatprep.subr.bf16.mxu0 %v1818
        %2354 = vmatpush1.bf16.xpose.msra.mxu0 %v1817
        %2355 = vmatprep.subr.bf16.mxu0 0
        %2356 = vmatpush2.bf16.xpose.msra.mxu0 0
        %2357 = vmatprep.subr.bf16.mxu0 0
        %2358 = vmatpush2.bf16.xpose.msra.mxu0 0
        %2359 = vmatprep.subr.bf16.mxu0 0
        %2360 = vmatpush2.bf16.xpose.msra.mxu0 0
        %2361 = vmatprep.subr.bf16.mxu0 0
        %2362 = vmatpush2.bf16.xpose.msra.mxu0 0
        %2363 = vmatprep.subr.bf16.mxu0 0
        %2364 = vmatpush2.bf16.xpose.msra.mxu0 0
        %2365 = vmatprep.subr.bf16.mxu0 0
        %2366 = vmatpush2.bf16.xpose.msra.mxu0 0
        %2367 = vmatprep.subr.bf16.mxu0 0
        %2368 = vmatpush2.bf16.xpose.msra.mxu0 0
        %2369 = vmatprep.subr.bf16.mxu0 0
        %2370 = vmatpush2.bf16.xpose.msra.mxu0 0
        %2371 = vmatprep.mubr.bf16.mxu0 %v1267
        %2372 = vmatmul.mubr.bf16.gmra.mxu0 %v1266
        %v2373 = vpop.f32.mrf.mxu0
        %v2374 = vadd.f32 %v2334, %v2373
        %v2375 = vpop.f32.mrf.mxu0
        %v2376 = vpop.f32.mrf.mxu0
        %v2377 = vpop.f32.mrf.mxu0
        %2378 = vdwg.mxu0
        %2379 = vmatprep.subr.bf16.mxu0 0
        %2380 = vmatpush1.bf16.xpose.msra.mxu0 0
        %2381 = vmatprep.subr.bf16.mxu0 0
        %2382 = vmatpush1.bf16.xpose.msra.mxu0 0
        %2383 = vmatprep.subr.bf16.mxu0 0
        %2384 = vmatpush1.bf16.xpose.msra.mxu0 0
        %2385 = vmatprep.subr.bf16.mxu0 0
        %2386 = vmatpush1.bf16.xpose.msra.mxu0 0
        %2387 = vmatprep.subr.bf16.mxu0 %v1916
        %2388 = vmatpush1.bf16.xpose.msra.mxu0 %v1915
        %2389 = vmatprep.subr.bf16.mxu0 %v1884
        %2390 = vmatpush1.bf16.xpose.msra.mxu0 %v1883
        %2391 = vmatprep.subr.bf16.mxu0 %v1852
        %2392 = vmatpush1.bf16.xpose.msra.mxu0 %v1851
        %2393 = vmatprep.subr.bf16.mxu0 %v1820
        %2394 = vmatpush1.bf16.xpose.msra.mxu0 %v1819
        %2395 = vmatprep.subr.bf16.mxu0 0
        %2396 = vmatpush2.bf16.xpose.msra.mxu0 0
        %2397 = vmatprep.subr.bf16.mxu0 0
        %2398 = vmatpush2.bf16.xpose.msra.mxu0 0
        %2399 = vmatprep.subr.bf16.mxu0 0
        %2400 = vmatpush2.bf16.xpose.msra.mxu0 0
        %2401 = vmatprep.subr.bf16.mxu0 0
        %2402 = vmatpush2.bf16.xpose.msra.mxu0 0
        %2403 = vmatprep.subr.bf16.mxu0 0
        %2404 = vmatpush2.bf16.xpose.msra.mxu0 0
        %2405 = vmatprep.subr.bf16.mxu0 0
        %2406 = vmatpush2.bf16.xpose.msra.mxu0 0
        %2407 = vmatprep.subr.bf16.mxu0 0
        %2408 = vmatpush2.bf16.xpose.msra.mxu0 0
        %2409 = vmatprep.subr.bf16.mxu0 0
        %2410 = vmatpush2.bf16.xpose.msra.mxu0 0
        %2411 = vmatprep.mubr.bf16.mxu0 %v1269
        %2412 = vmatmul.mubr.bf16.gmra.mxu0 %v1268
        %v2413 = vpop.f32.mrf.mxu0
        %v2414 = vadd.f32 %v2374, %v2413
        %v2415 = vpop.f32.mrf.mxu0
        %v2416 = vpop.f32.mrf.mxu0
        %v2417 = vpop.f32.mrf.mxu0
        %2418 = vdwg.mxu0
        %2419 = vmatprep.subr.bf16.mxu0 0
        %2420 = vmatpush1.bf16.xpose.msra.mxu0 0
        %2421 = vmatprep.subr.bf16.mxu0 0
        %2422 = vmatpush1.bf16.xpose.msra.mxu0 0
        %2423 = vmatprep.subr.bf16.mxu0 0
        %2424 = vmatpush1.bf16.xpose.msra.mxu0 0
        %2425 = vmatprep.subr.bf16.mxu0 0
        %2426 = vmatpush1.bf16.xpose.msra.mxu0 0
        %2427 = vmatprep.subr.bf16.mxu0 %v1918
        %2428 = vmatpush1.bf16.xpose.msra.mxu0 %v1917
        %2429 = vmatprep.subr.bf16.mxu0 %v1886
        %2430 = vmatpush1.bf16.xpose.msra.mxu0 %v1885
        %2431 = vmatprep.subr.bf16.mxu0 %v1854
        %2432 = vmatpush1.bf16.xpose.msra.mxu0 %v1853
        %2433 = vmatprep.subr.bf16.mxu0 %v1822
        %2434 = vmatpush1.bf16.xpose.msra.mxu0 %v1821
        %2435 = vmatprep.subr.bf16.mxu0 0
        %2436 = vmatpush2.bf16.xpose.msra.mxu0 0
        %2437 = vmatprep.subr.bf16.mxu0 0
        %2438 = vmatpush2.bf16.xpose.msra.mxu0 0
        %2439 = vmatprep.subr.bf16.mxu0 0
        %2440 = vmatpush2.bf16.xpose.msra.mxu0 0
        %2441 = vmatprep.subr.bf16.mxu0 0
        %2442 = vmatpush2.bf16.xpose.msra.mxu0 0
        %2443 = vmatprep.subr.bf16.mxu0 0
        %2444 = vmatpush2.bf16.xpose.msra.mxu0 0
        %2445 = vmatprep.subr.bf16.mxu0 0
        %2446 = vmatpush2.bf16.xpose.msra.mxu0 0
        %2447 = vmatprep.subr.bf16.mxu0 0
        %2448 = vmatpush2.bf16.xpose.msra.mxu0 0
        %2449 = vmatprep.subr.bf16.mxu0 0
        %2450 = vmatpush2.bf16.xpose.msra.mxu0 0
        %2451 = vmatprep.mubr.bf16.mxu0 %v1271
        %2452 = vmatmul.mubr.bf16.gmra.mxu0 %v1270
        %v2453 = vpop.f32.mrf.mxu0
        %v2454 = vadd.f32 %v2414, %v2453
        %v2455 = vpop.f32.mrf.mxu0
        %v2456 = vpop.f32.mrf.mxu0
        %v2457 = vpop.f32.mrf.mxu0
        %2458 = vdwg.mxu0
        %2459 = vmatprep.subr.bf16.mxu0 0
        %2460 = vmatpush1.bf16.xpose.msra.mxu0 0
        %2461 = vmatprep.subr.bf16.mxu0 0
        %2462 = vmatpush1.bf16.xpose.msra.mxu0 0
        %2463 = vmatprep.subr.bf16.mxu0 0
        %2464 = vmatpush1.bf16.xpose.msra.mxu0 0
        %2465 = vmatprep.subr.bf16.mxu0 0
        %2466 = vmatpush1.bf16.xpose.msra.mxu0 0
        %2467 = vmatprep.subr.bf16.mxu0 %v1920
        %2468 = vmatpush1.bf16.xpose.msra.mxu0 %v1919
        %2469 = vmatprep.subr.bf16.mxu0 %v1888
        %2470 = vmatpush1.bf16.xpose.msra.mxu0 %v1887
        %2471 = vmatprep.subr.bf16.mxu0 %v1856
        %2472 = vmatpush1.bf16.xpose.msra.mxu0 %v1855
        %2473 = vmatprep.subr.bf16.mxu0 %v1824
        %2474 = vmatpush1.bf16.xpose.msra.mxu0 %v1823
        %2475 = vmatprep.subr.bf16.mxu0 0
        %2476 = vmatpush2.bf16.xpose.msra.mxu0 0
        %2477 = vmatprep.subr.bf16.mxu0 0
        %2478 = vmatpush2.bf16.xpose.msra.mxu0 0
        %2479 = vmatprep.subr.bf16.mxu0 0
        %2480 = vmatpush2.bf16.xpose.msra.mxu0 0
        %2481 = vmatprep.subr.bf16.mxu0 0
        %2482 = vmatpush2.bf16.xpose.msra.mxu0 0
        %2483 = vmatprep.subr.bf16.mxu0 0
        %2484 = vmatpush2.bf16.xpose.msra.mxu0 0
        %2485 = vmatprep.subr.bf16.mxu0 0
        %2486 = vmatpush2.bf16.xpose.msra.mxu0 0
        %2487 = vmatprep.subr.bf16.mxu0 0
        %2488 = vmatpush2.bf16.xpose.msra.mxu0 0
        %2489 = vmatprep.subr.bf16.mxu0 0
        %2490 = vmatpush2.bf16.xpose.msra.mxu0 0
        %2491 = vmatprep.mubr.bf16.mxu0 %v1273
        %2492 = vmatmul.mubr.bf16.gmra.mxu0 %v1272
        %v2493 = vpop.f32.mrf.mxu0
        %v2494 = vadd.f32 %v2454, %v2493
        %v2495 = vpop.f32.mrf.mxu0
        %v2496 = vpop.f32.mrf.mxu0
        %v2497 = vpop.f32.mrf.mxu0
        %2498 = vdwg.mxu0
        %2499 = vmatprep.subr.bf16.mxu0 0
        %2500 = vmatpush1.bf16.xpose.msra.mxu0 0
        %2501 = vmatprep.subr.bf16.mxu0 0
        %2502 = vmatpush1.bf16.xpose.msra.mxu0 0
        %2503 = vmatprep.subr.bf16.mxu0 0
        %2504 = vmatpush1.bf16.xpose.msra.mxu0 0
        %2505 = vmatprep.subr.bf16.mxu0 0
        %2506 = vmatpush1.bf16.xpose.msra.mxu0 0
        %2507 = vmatprep.subr.bf16.mxu0 %v1922
        %2508 = vmatpush1.bf16.xpose.msra.mxu0 %v1921
        %2509 = vmatprep.subr.bf16.mxu0 %v1890
        %2510 = vmatpush1.bf16.xpose.msra.mxu0 %v1889
        %2511 = vmatprep.subr.bf16.mxu0 %v1858
        %2512 = vmatpush1.bf16.xpose.msra.mxu0 %v1857
        %2513 = vmatprep.subr.bf16.mxu0 %v1826
        %2514 = vmatpush1.bf16.xpose.msra.mxu0 %v1825
        %2515 = vmatprep.subr.bf16.mxu0 0
        %2516 = vmatpush2.bf16.xpose.msra.mxu0 0
        %2517 = vmatprep.subr.bf16.mxu0 0
        %2518 = vmatpush2.bf16.xpose.msra.mxu0 0
        %2519 = vmatprep.subr.bf16.mxu0 0
        %2520 = vmatpush2.bf16.xpose.msra.mxu0 0
        %2521 = vmatprep.subr.bf16.mxu0 0
        %2522 = vmatpush2.bf16.xpose.msra.mxu0 0
        %2523 = vmatprep.subr.bf16.mxu0 0
        %2524 = vmatpush2.bf16.xpose.msra.mxu0 0
        %2525 = vmatprep.subr.bf16.mxu0 0
        %2526 = vmatpush2.bf16.xpose.msra.mxu0 0
        %2527 = vmatprep.subr.bf16.mxu0 0
        %2528 = vmatpush2.bf16.xpose.msra.mxu0 0
        %2529 = vmatprep.subr.bf16.mxu0 0
        %2530 = vmatpush2.bf16.xpose.msra.mxu0 0
        %2531 = vmatprep.mubr.bf16.mxu0 %v1275
        %2532 = vmatmul.mubr.bf16.gmra.mxu0 %v1274
        %v2533 = vpop.f32.mrf.mxu0
        %v2534 = vadd.f32 %v2494, %v2533
        %v2535 = vpop.f32.mrf.mxu0
        %v2536 = vpop.f32.mrf.mxu0
        %v2537 = vpop.f32.mrf.mxu0
        %2538 = vdwg.mxu0
        %2539 = vmatprep.subr.bf16.mxu0 0
        %2540 = vmatpush1.bf16.xpose.msra.mxu0 0
        %2541 = vmatprep.subr.bf16.mxu0 0
        %2542 = vmatpush1.bf16.xpose.msra.mxu0 0
        %2543 = vmatprep.subr.bf16.mxu0 0
        %2544 = vmatpush1.bf16.xpose.msra.mxu0 0
        %2545 = vmatprep.subr.bf16.mxu0 0
        %2546 = vmatpush1.bf16.xpose.msra.mxu0 0
        %2547 = vmatprep.subr.bf16.mxu0 %v1924
        %2548 = vmatpush1.bf16.xpose.msra.mxu0 %v1923
        %2549 = vmatprep.subr.bf16.mxu0 %v1892
        %2550 = vmatpush1.bf16.xpose.msra.mxu0 %v1891
        %2551 = vmatprep.subr.bf16.mxu0 %v1860
        %2552 = vmatpush1.bf16.xpose.msra.mxu0 %v1859
        %2553 = vmatprep.subr.bf16.mxu0 %v1828
        %2554 = vmatpush1.bf16.xpose.msra.mxu0 %v1827
        %2555 = vmatprep.subr.bf16.mxu0 0
        %2556 = vmatpush2.bf16.xpose.msra.mxu0 0
        %2557 = vmatprep.subr.bf16.mxu0 0
        %2558 = vmatpush2.bf16.xpose.msra.mxu0 0
        %2559 = vmatprep.subr.bf16.mxu0 0
        %2560 = vmatpush2.bf16.xpose.msra.mxu0 0
        %2561 = vmatprep.subr.bf16.mxu0 0
        %2562 = vmatpush2.bf16.xpose.msra.mxu0 0
        %2563 = vmatprep.subr.bf16.mxu0 0
        %2564 = vmatpush2.bf16.xpose.msra.mxu0 0
        %2565 = vmatprep.subr.bf16.mxu0 0
        %2566 = vmatpush2.bf16.xpose.msra.mxu0 0
        %2567 = vmatprep.subr.bf16.mxu0 0
        %2568 = vmatpush2.bf16.xpose.msra.mxu0 0
        %2569 = vmatprep.subr.bf16.mxu0 0
        %2570 = vmatpush2.bf16.xpose.msra.mxu0 0
        %2571 = vmatprep.mubr.bf16.mxu0 %v1277
        %2572 = vmatmul.mubr.bf16.gmra.mxu0 %v1276
        %v2573 = vpop.f32.mrf.mxu0
        %v2574 = vadd.f32 %v2534, %v2573
        %v2575 = vpop.f32.mrf.mxu0
        %v2576 = vpop.f32.mrf.mxu0
        %v2577 = vpop.f32.mrf.mxu0
        %2578 = vdwg.mxu0
        %2579 = vmatprep.subr.bf16.mxu0 0
        %2580 = vmatpush1.bf16.xpose.msra.mxu0 0
        %2581 = vmatprep.subr.bf16.mxu0 0
        %2582 = vmatpush1.bf16.xpose.msra.mxu0 0
        %2583 = vmatprep.subr.bf16.mxu0 0
        %2584 = vmatpush1.bf16.xpose.msra.mxu0 0
        %2585 = vmatprep.subr.bf16.mxu0 0
        %2586 = vmatpush1.bf16.xpose.msra.mxu0 0
        %2587 = vmatprep.subr.bf16.mxu0 %v1926
        %2588 = vmatpush1.bf16.xpose.msra.mxu0 %v1925
        %2589 = vmatprep.subr.bf16.mxu0 %v1894
        %2590 = vmatpush1.bf16.xpose.msra.mxu0 %v1893
        %2591 = vmatprep.subr.bf16.mxu0 %v1862
        %2592 = vmatpush1.bf16.xpose.msra.mxu0 %v1861
        %2593 = vmatprep.subr.bf16.mxu0 %v1830
        %2594 = vmatpush1.bf16.xpose.msra.mxu0 %v1829
        %2595 = vmatprep.subr.bf16.mxu0 0
        %2596 = vmatpush2.bf16.xpose.msra.mxu0 0
        %2597 = vmatprep.subr.bf16.mxu0 0
        %2598 = vmatpush2.bf16.xpose.msra.mxu0 0
        %2599 = vmatprep.subr.bf16.mxu0 0
        %2600 = vmatpush2.bf16.xpose.msra.mxu0 0
        %2601 = vmatprep.subr.bf16.mxu0 0
        %2602 = vmatpush2.bf16.xpose.msra.mxu0 0
        %2603 = vmatprep.subr.bf16.mxu0 0
        %2604 = vmatpush2.bf16.xpose.msra.mxu0 0
        %2605 = vmatprep.subr.bf16.mxu0 0
        %2606 = vmatpush2.bf16.xpose.msra.mxu0 0
        %2607 = vmatprep.subr.bf16.mxu0 0
        %2608 = vmatpush2.bf16.xpose.msra.mxu0 0
        %2609 = vmatprep.subr.bf16.mxu0 0
        %2610 = vmatpush2.bf16.xpose.msra.mxu0 0
        %2611 = vmatprep.mubr.bf16.mxu0 %v1279
        %2612 = vmatmul.mubr.bf16.gmra.mxu0 %v1278
        %v2613 = vpop.f32.mrf.mxu0
        %v2614 = vadd.f32 %v2574, %v2613
        %v2615 = vpop.f32.mrf.mxu0
        %v2616 = vpop.f32.mrf.mxu0
        %v2617 = vpop.f32.mrf.mxu0
        %2618 = vdwg.mxu0
        %2619 = vmatprep.subr.bf16.mxu0 0
        %2620 = vmatpush1.bf16.xpose.msra.mxu0 0
        %2621 = vmatprep.subr.bf16.mxu0 0
        %2622 = vmatpush1.bf16.xpose.msra.mxu0 0
        %2623 = vmatprep.subr.bf16.mxu0 0
        %2624 = vmatpush1.bf16.xpose.msra.mxu0 0
        %2625 = vmatprep.subr.bf16.mxu0 0
        %2626 = vmatpush1.bf16.xpose.msra.mxu0 0
        %2627 = vmatprep.subr.bf16.mxu0 %v1928
        %2628 = vmatpush1.bf16.xpose.msra.mxu0 %v1927
        %2629 = vmatprep.subr.bf16.mxu0 %v1896
        %2630 = vmatpush1.bf16.xpose.msra.mxu0 %v1895
        %2631 = vmatprep.subr.bf16.mxu0 %v1864
        %2632 = vmatpush1.bf16.xpose.msra.mxu0 %v1863
        %2633 = vmatprep.subr.bf16.mxu0 %v1832
        %2634 = vmatpush1.bf16.xpose.msra.mxu0 %v1831
        %2635 = vmatprep.subr.bf16.mxu0 0
        %2636 = vmatpush2.bf16.xpose.msra.mxu0 0
        %2637 = vmatprep.subr.bf16.mxu0 0
        %2638 = vmatpush2.bf16.xpose.msra.mxu0 0
        %2639 = vmatprep.subr.bf16.mxu0 0
        %2640 = vmatpush2.bf16.xpose.msra.mxu0 0
        %2641 = vmatprep.subr.bf16.mxu0 0
        %2642 = vmatpush2.bf16.xpose.msra.mxu0 0
        %2643 = vmatprep.subr.bf16.mxu0 0
        %2644 = vmatpush2.bf16.xpose.msra.mxu0 0
        %2645 = vmatprep.subr.bf16.mxu0 0
        %2646 = vmatpush2.bf16.xpose.msra.mxu0 0
        %2647 = vmatprep.subr.bf16.mxu0 0
        %2648 = vmatpush2.bf16.xpose.msra.mxu0 0
        %2649 = vmatprep.subr.bf16.mxu0 0
        %2650 = vmatpush2.bf16.xpose.msra.mxu0 0
        %2651 = vmatprep.mubr.bf16.mxu0 %v1281
        %2652 = vmatmul.mubr.bf16.gmra.mxu0 %v1280
        %v2653 = vpop.f32.mrf.mxu0
        %v2654 = vadd.f32 %v2614, %v2653
        %v2655 = vpop.f32.mrf.mxu0
        %v2656 = vpop.f32.mrf.mxu0
        %v2657 = vpop.f32.mrf.mxu0
        %2658 = vdwg.mxu0
        %2659 = vmatprep.subr.bf16.mxu0 0
        %2660 = vmatpush1.bf16.xpose.msra.mxu0 0
        %2661 = vmatprep.subr.bf16.mxu0 0
        %2662 = vmatpush1.bf16.xpose.msra.mxu0 0
        %2663 = vmatprep.subr.bf16.mxu0 0
        %2664 = vmatpush1.bf16.xpose.msra.mxu0 0
        %2665 = vmatprep.subr.bf16.mxu0 0
        %2666 = vmatpush1.bf16.xpose.msra.mxu0 0
        %2667 = vmatprep.subr.bf16.mxu0 %v1930
        %2668 = vmatpush1.bf16.xpose.msra.mxu0 %v1929
        %2669 = vmatprep.subr.bf16.mxu0 %v1898
        %2670 = vmatpush1.bf16.xpose.msra.mxu0 %v1897
        %2671 = vmatprep.subr.bf16.mxu0 %v1866
        %2672 = vmatpush1.bf16.xpose.msra.mxu0 %v1865
        %2673 = vmatprep.subr.bf16.mxu0 %v1834
        %2674 = vmatpush1.bf16.xpose.msra.mxu0 %v1833
        %2675 = vmatprep.subr.bf16.mxu0 0
        %2676 = vmatpush2.bf16.xpose.msra.mxu0 0
        %2677 = vmatprep.subr.bf16.mxu0 0
        %2678 = vmatpush2.bf16.xpose.msra.mxu0 0
        %2679 = vmatprep.subr.bf16.mxu0 0
        %2680 = vmatpush2.bf16.xpose.msra.mxu0 0
        %2681 = vmatprep.subr.bf16.mxu0 0
        %2682 = vmatpush2.bf16.xpose.msra.mxu0 0
        %2683 = vmatprep.subr.bf16.mxu0 0
        %2684 = vmatpush2.bf16.xpose.msra.mxu0 0
        %2685 = vmatprep.subr.bf16.mxu0 0
        %2686 = vmatpush2.bf16.xpose.msra.mxu0 0
        %2687 = vmatprep.subr.bf16.mxu0 0
        %2688 = vmatpush2.bf16.xpose.msra.mxu0 0
        %2689 = vmatprep.subr.bf16.mxu0 0
        %2690 = vmatpush2.bf16.xpose.msra.mxu0 0
        %2691 = vmatprep.mubr.bf16.mxu0 %v1283
        %2692 = vmatmul.mubr.bf16.gmra.mxu0 %v1282
        %v2693 = vpop.f32.mrf.mxu0
        %v2694 = vadd.f32 %v2654, %v2693
        %v2695 = vpop.f32.mrf.mxu0
        %v2696 = vpop.f32.mrf.mxu0
        %v2697 = vpop.f32.mrf.mxu0
        %2698 = vdwg.mxu0
        %v2699 = vmax.f32 %v2694, 0.0
        %vm2700 = vcmask 517120
        %2701 = vst.msk [vmem:[%s312] sm:$0x3] %vm2700, %v2699
        %p2702 = scmp.lt.s32.totalorder %s21, 1
        %s2703 = scalar_select %p2702, %s21, 1
        %s2704 = smul.addr %s2703, 2
        %s2705 = scalar_lea.vmem %s7, %s2704
        // Predicated region
        $region53: #{simple_cnn_forward.1} parent=47 // pred_check
          %p2706 = pneg %p196
        $region54: #{simple_cnn_forward.1} parent=47 // pred_check_branch
          %2708 = sbr.rel (%p2706) target = $region56
        $region55: #{simple_cnn_forward.1} parent=47 // pred_region
          _
        $region56: #{simple_cnn_forward.1} parent=47 // pred_fallthru
          _
      $region48: #{simple_cnn_forward.1} parent=5 // pred_fallthru
        _
      %p2709 = scmp.le.s32.totalorder 2, %s16
      // Predicated region
      $region57: #{simple_cnn_forward.1} parent=5 // pred_check
        %p2710 = pneg %p2709
      $region58: #{simple_cnn_forward.1} parent=5 // pred_check_branch
        %2712 = sbr.rel (%p2710) target = $region60
      $region59: #{simple_cnn_forward.1} parent=5 // pred_region
        %s2713 = ssub.s32 %s16, 2
        // Predicated region
        $region61: #{simple_cnn_forward.1} parent=59 // pred_check
          %p2714 = pneg %p202
        $region62: #{simple_cnn_forward.1} parent=59 // pred_check_branch
          %2716 = sbr.rel (%p2714) target = $region64
        $region63: #{simple_cnn_forward.1} parent=59 // pred_region
          %p2717 = scmp.lt.s32.totalorder %s22, 1
          %s2718 = scalar_select %p2717, %s22, 1
          %s2719 = smul.addr %s2718, 2
          %s2720 = scalar_lea.vmem %s7, %s2719
        $region64: #{simple_cnn_forward.1} parent=59 // pred_fallthru
          _
      $region60: #{simple_cnn_forward.1} parent=5 // pred_fallthru
        _
    $region6: #{simple_cnn_forward.1} parent=1 // loop_footer
      %s20 = sadd.s32 1, %s16
    $region7: #{simple_cnn_forward.1} parent=1 // loop_footer_branch
      %15 = sbr.rel target = $region3
    $region8: #{simple_cnn_forward.1} parent=1 // loop_exit
      _
    %2721 = vsyncpa [#allocation3], 1
    %s2722 = scalar_lea.sflag [#allocation3], 1
    %2723 = vsyncpa %s2722, 1

</llo_original>
